<compile_context>
chip_gen: v7x
topology: tpu7x:2x2x1
jax: 0.10.0
libtpu: 0.0.40
codegen_flags: <defaults>
</compile_context>

<pallas_src>
import jax
import jax.numpy as jnp
from jax import lax
from jax.experimental import pallas as pl
from jax.experimental.pallas import tpu as pltpu


# ----------------------------- Pallas kernels ------------------------------


def conv_pool_relu_kernel(p_ref, w_ref, b_ref, o_ref):
    """Fused conv(3x3, pad=1) + bias + maxpool(2,2) + ReLU for one M-tile.

    p_ref: (4, TM, K)   im2col patches for the four pooling parities.
    w_ref: (K, Cout)    conv weights (HWIO flattened).
    b_ref: (1, Cout)    bias.
    o_ref: (TM, Cout)   pooled + activated output rows (M = N*Ho*Wo globally).
    """
    par, tm, k = p_ref.shape           # par == 4
    cout = o_ref.shape[-1]
    # One merged MXU matmul for all four parities (single RHS push, 4x longer M).
    p = p_ref[...].reshape(par * tm, k)                      # leading-dim merge (free)
    y = jnp.dot(p, w_ref[...], preferred_element_type=jnp.float32)  # (4*TM, Cout)
    # 2x2 max-pool == elementwise max over the four parity slabs (static sublane slices).
    y = jnp.maximum(jnp.maximum(y[0 * tm:1 * tm], y[1 * tm:2 * tm]),
                    jnp.maximum(y[2 * tm:3 * tm], y[3 * tm:4 * tm]))
    # max(conv) + bias == max(conv + bias) because bias is a per-channel constant.
    o_ref[...] = jnp.maximum(y + b_ref[...], 0.0)


def fc_fused_kernel(x_ref, w1_ref, b1_ref, w2_ref, b2_ref, w3_ref, b3_ref, o_ref):
    """Fused fc1(+ReLU) -> fc2(+ReLU) -> fc3.  Intermediates never leave VMEM/vregs.

    fc3 (output width 1) is done as a VPU multiply + lane-sum reduction instead of a
    (M,128)x(128,1) matmul, avoiding a 1-column MXU pass and a 1-lane masked store path.
    """
    h = jnp.dot(x_ref[...], w1_ref[...], preferred_element_type=jnp.float32) + b1_ref[...]
    h = jnp.maximum(h, 0.0)
    h = jnp.dot(h, w2_ref[...], preferred_element_type=jnp.float32) + b2_ref[...]
    h = jnp.maximum(h, 0.0)
    y = jnp.sum(h * w3_ref[...], axis=-1, keepdims=True) + b3_ref[...]
    o_ref[...] = y


# ------------------------------ JAX glue -----------------------------------


def _stacked_parity_im2col(x_nhwc):
    """Build a single stacked (4, M, 9*Cin) im2col tensor for a 3x3 / pad=1 conv
    followed by a 2x2 maxpool (parities = even/even, even/odd, odd/even, odd/odd
    output positions).  Pure gather/reshape glue kept in plain JAX.
    """
    N, H, W, C = x_nhwc.shape
    Ho, Wo = H // 2, W // 2
    xp = jnp.pad(x_nhwc, ((0, 0), (1, 1), (1, 1), (0, 0)))
    parities = []
    for pr in range(2):
        for pc in range(2):
            taps = []
            for kh in range(3):
                for kw in range(3):
                    sub = xp[:, pr + kh: pr + kh + H: 2, pc + kw: pc + kw + W: 2, :]
                    taps.append(sub)  # (N, Ho, Wo, C)
            parities.append(jnp.concatenate(taps, axis=-1).reshape(N * Ho * Wo, 9 * C))
    return jnp.stack(parities, axis=0)  # (4, M, 9*C)


def _pick_tile(total, target):
    """Largest divisor of `total` that is a multiple of 8 and <= target; falls back to
    the full extent (always a legal block)."""
    if total <= target:
        return total
    best = total
    for d in range(8, target + 1, 8):
        if total % d == 0:
            best = d
    return best


def conv_block(x_nhwc, w_hwio, b):
    """One ConvNet2 conv layer: Conv2d(3x3, pad=1) -> MaxPool2d(2,2) -> ReLU."""
    N, H, W, Cin = x_nhwc.shape
    Cout = w_hwio.shape[-1]
    Ho, Wo = H // 2, W // 2
    M = N * Ho * Wo
    K = 9 * Cin
    assert M % 8 == 0, "pooled spatial size * batch must be a multiple of 8"

    patches = _stacked_parity_im2col(x_nhwc)   # (4, M, K)
    wmat = w_hwio.reshape(K, Cout)
    bmat = b.reshape(1, Cout)

    # ~512 patch rows per grid step keeps the double-buffered footprint ~2.5 MiB for
    # K=144 — safely inside v5e's 16 MiB scoped default and v7x's 32 MiB default.
    TM = _pick_tile(M, 512)
    grid = (M // TM,)

    out = pl.pallas_call(
        conv_pool_relu_kernel,
        out_shape=jax.ShapeDtypeStruct((M, Cout), jnp.float32),
        grid=grid,
        in_specs=[
            pl.BlockSpec((4, TM, K), lambda i: (0, i, 0)),
            pl.BlockSpec((K, Cout), lambda i: (0, 0)),
            pl.BlockSpec((1, Cout), lambda i: (0, 0)),
        ],
        out_specs=pl.BlockSpec((TM, Cout), lambda i: (i, 0)),
        compiler_params=pltpu.CompilerParams(
            # Independent output tiles: shard across v7x's 2 TensorCores.
            dimension_semantics=("parallel",)
        ),
    )(patches, wmat, bmat)
    return out.reshape(N, Ho, Wo, Cout)


def fc_head(x, w1, b1, w2, b2, w3, b3):
    """Fused fc1 -> fc2 -> fc3 head (single pallas_call, weights resident in VMEM)."""
    Nb, F = x.shape
    H1 = w1.shape[1]
    H2 = w2.shape[1]
    return pl.pallas_call(
        fc_fused_kernel,
        out_shape=jax.ShapeDtypeStruct((Nb, 1), jnp.float32),
        grid=(1,),   # batch is tiny here; tile + mark "parallel" for large batches
        in_specs=[
            pl.BlockSpec((Nb, F), lambda i: (0, 0)),
            pl.BlockSpec((F, H1), lambda i: (0, 0)),
            pl.BlockSpec((1, H1), lambda i: (0, 0)),
            pl.BlockSpec((H1, H2), lambda i: (0, 0)),
            pl.BlockSpec((1, H2), lambda i: (0, 0)),
            pl.BlockSpec((1, H2), lambda i: (0, 0)),
            pl.BlockSpec((1, 1), lambda i: (0, 0)),
        ],
        out_specs=pl.BlockSpec((Nb, 1), lambda i: (0, 0)),
        compiler_params=pltpu.CompilerParams(dimension_semantics=("arbitrary",)),
    )(x, w1, b1.reshape(1, H1), w2, b2.reshape(1, H2), w3.reshape(1, H2), b3.reshape(1, 1))


# --------------------------- ConvNet2 params & forward -----------------------


def init_params(key, input_size, in_channels, n_conv_layers):
    channels = [in_channels] + [16 * 2 ** i for i in range(n_conv_layers)]
    params = {"conv": []}
    for i in range(n_conv_layers):
        key, k1, k2 = jax.random.split(key, 3)
        cin, cout = channels[i], channels[i + 1]
        fan_in = 9 * cin
        w = jax.random.normal(k1, (3, 3, cin, cout), jnp.float32) / jnp.sqrt(fan_in)
        b = jax.random.normal(k2, (cout,), jnp.float32) * 0.01
        params["conv"].append((w, b))

    hf = input_size[0] // 2 ** n_conv_layers
    wf = input_size[1] // 2 ** n_conv_layers
    cf = channels[-1]
    flat = cf * hf * wf
    dims = [(flat, 512), (512, 128), (128, 1)]
    for name, (din, dout) in zip(("fc1", "fc2", "fc3"), dims):
        key, k1, k2 = jax.random.split(key, 3)
        w = jax.random.normal(k1, (din, dout), jnp.float32) / jnp.sqrt(din)
        b = jax.random.normal(k2, (dout,), jnp.float32) * 0.01
        params[name] = (w, b)

    # One-time permutation of fc1's rows from PyTorch's NCHW flatten order to the NHWC
    # flatten order used by the Pallas path — replaces a per-forward activation
    # transpose (HBM relayout of the whole feature map) with a free weight relayout.
    w1, b1 = params["fc1"]
    w1_nhwc = w1.reshape(cf, hf, wf, w1.shape[1]).transpose(1, 2, 0, 3).reshape(flat, -1)
    params["fc1_nhwc"] = (w1_nhwc, b1)
    return params


def convnet2_forward(x_nchw, params):
    # NCHW input -> NHWC once (channels on the lane axis for the conv kernels).
    x = jnp.transpose(x_nchw, (0, 2, 3, 1)).astype(jnp.float32)
    for (w, b) in params["conv"]:
        x = conv_block(x, w, b)
    N = x.shape[0]
    # NHWC flatten (no transpose back to NCHW: fc1 weights were permuted at init).
    x = x.reshape(N, -1)
    w1, b1 = params["fc1_nhwc"]
    w2, b2 = params["fc2"]
    w3, b3 = params["fc3"]
    return fc_head(x, w1, b1, w2, b2, w3, b3)


# --------------------------- Pure-JAX reference ------------------------------


def convnet2_reference(x_nchw, params):
    x = jnp.transpose(x_nchw, (0, 2, 3, 1)).astype(jnp.float32)
    for (w, b) in params["conv"]:
        y = lax.conv_general_dilated(
            x, w, window_strides=(1, 1), padding="SAME",
            dimension_numbers=("NHWC", "HWIO", "NHWC"),
        ) + b[None, None, None, :]
        y = lax.reduce_window(
            y, -jnp.inf, lax.max, (1, 2, 2, 1), (1, 2, 2, 1), "VALID"
        )
        x = jnp.maximum(y, 0.0)
    N = x.shape[0]
    x = jnp.transpose(x, (0, 3, 1, 2)).reshape(N, -1)  # PyTorch's NCHW .view(-1, C*H*W)
    x = jnp.maximum(x @ params["fc1"][0] + params["fc1"][1], 0.0)
    x = jnp.maximum(x @ params["fc2"][0] + params["fc2"][1], 0.0)
    x = x @ params["fc3"][0] + params["fc3"][1]
    return x


if __name__ == "__main__":
    configs = [
        # (input_size, in_channels, n_conv_layers, batch)
        ((16, 16), 4, 2, 2),   # primary small config
        ((32, 32), 4, 2, 4),   # larger config: exercises a multi-step ("parallel") grid
    ]
    fwd = jax.jit(convnet2_forward)
    for input_size, in_channels, n_conv_layers, batch in configs:
        key = jax.random.PRNGKey(0)
        key, kx = jax.random.split(key)
        x = jax.random.normal(kx, (batch, in_channels, *input_size), jnp.float32)
        params = init_params(key, input_size, in_channels, n_conv_layers)

        out = jax.block_until_ready(fwd(x, params))
        ref = jax.block_until_ready(convnet2_reference(x, params))

        assert out.shape == (batch, 1), out.shape
        assert jnp.allclose(out, ref, atol=1e-3, rtol=1e-3), (out, ref)
    print("KERNEL_OK")
</pallas_src>

<mosaic_0001>
module attributes {stable_mosaic.version = 11 : i64} {
  func.func @conv_pool_relu_kernel(%arg0: i32, %arg1: memref<4x128x36xf32, #tpu.memory_space<vmem>>, %arg2: memref<36x16xf32, #tpu.memory_space<vmem>>, %arg3: memref<1x16xf32, #tpu.memory_space<vmem>>, %arg4: memref<128x16xf32, #tpu.memory_space<vmem>>) attributes {dimension_semantics = [#tpu.dimension_semantics<parallel>], iteration_bounds = array<i64: 1>, scalar_prefetch = 0 : i64, scratch_operands = 0 : i64, tpu.core_type = #tpu.core_type<tc>, window_params = [{transform_indices = @transform_0, window_bounds = array<i64: 4, 128, 36>}, {pipeline_mode = #tpu.pipeline_mode<synchronous>, transform_indices = @transform_1, window_bounds = array<i64: 36, 16>}, {pipeline_mode = #tpu.pipeline_mode<synchronous>, transform_indices = @transform_2, window_bounds = array<i64: 1, 16>}, {transform_indices = @transform_3, window_bounds = array<i64: 128, 16>}]} {
    %c0 = arith.constant 0 : index
    %c0_0 = arith.constant 0 : index
    %c0_1 = arith.constant 0 : index
    %0 = vector.load %arg1[%c0, %c0_0, %c0_1] : memref<4x128x36xf32, #tpu.memory_space<vmem>>, vector<4x128x36xf32>
    %1 = vector.shape_cast %0 : vector<4x128x36xf32> to vector<512x36xf32>
    %c0_2 = arith.constant 0 : index
    %c0_3 = arith.constant 0 : index
    %2 = vector.load %arg2[%c0_2, %c0_3] : memref<36x16xf32, #tpu.memory_space<vmem>>, vector<36x16xf32>
    %cst = arith.constant dense<0.000000e+00> : vector<512x16xf32>
    %3 = tpu.matmul %1, %2, %cst {dimension_numbers = #tpu.dot_dimension_numbers<[1], [0], [0], [1], [0, 0, 1, 1], [], []>} : vector<512x36xf32>, vector<36x16xf32>, vector<512x16xf32> -> vector<512x16xf32>
    %4 = vector.extract_strided_slice %3 {offsets = [0, 0], sizes = [128, 16], strides = [1, 1]} : vector<512x16xf32> to vector<128x16xf32>
    %5 = vector.extract_strided_slice %3 {offsets = [128, 0], sizes = [128, 16], strides = [1, 1]} : vector<512x16xf32> to vector<128x16xf32>
    %6 = arith.maximumf %4, %5 : vector<128x16xf32>
    %7 = vector.extract_strided_slice %3 {offsets = [256, 0], sizes = [128, 16], strides = [1, 1]} : vector<512x16xf32> to vector<128x16xf32>
    %8 = vector.extract_strided_slice %3 {offsets = [384, 0], sizes = [128, 16], strides = [1, 1]} : vector<512x16xf32> to vector<128x16xf32>
    %9 = arith.maximumf %7, %8 : vector<128x16xf32>
    %10 = arith.maximumf %6, %9 : vector<128x16xf32>
    %c0_4 = arith.constant 0 : index
    %c0_5 = arith.constant 0 : index
    %11 = vector.load %arg3[%c0_4, %c0_5] : memref<1x16xf32, #tpu.memory_space<vmem>>, vector<1x16xf32>
    %12 = vector.broadcast %11 : vector<1x16xf32> to vector<128x16xf32>
    %13 = arith.addf %10, %12 : vector<128x16xf32>
    %cst_6 = arith.constant 0.000000e+00 : f32
    %14 = vector.broadcast %cst_6 : f32 to vector<128x16xf32>
    %15 = arith.maximumf %13, %14 : vector<128x16xf32>
    %c0_7 = arith.constant 0 : index
    %c0_8 = arith.constant 0 : index
    %16 = vector.load %arg4[%c0_7, %c0_8] : memref<128x16xf32, #tpu.memory_space<vmem>>, vector<128x16xf32>
    tpu.vector_store %arg4[%c0_7, %c0_8], %15 {strides = array<i32>} : memref<128x16xf32, #tpu.memory_space<vmem>>, vector<128x16xf32>,
    return
  }
  func.func @transform_0(%arg0: i32) -> (i32, i32, i32) {
    %c0_i32 = arith.constant 0 : i32
    %c0_i32_0 = arith.constant 0 : i32
    %c0_i32_1 = arith.constant 0 : i32
    return %c0_i32, %arg0, %c0_i32_0 : i32, i32, i32
  }
  func.func @transform_1(%arg0: i32) -> (i32, i32) {
    %c0_i32 = arith.constant 0 : i32
    %c0_i32_0 = arith.constant 0 : i32
    %c0_i32_1 = arith.constant 0 : i32
    return %c0_i32, %c0_i32_0 : i32, i32
  }
  func.func @transform_2(%arg0: i32) -> (i32, i32) {
    %c0_i32 = arith.constant 0 : i32
    %c0_i32_0 = arith.constant 0 : i32
    %c0_i32_1 = arith.constant 0 : i32
    return %c0_i32, %c0_i32_0 : i32, i32
  }
  func.func @transform_3(%arg0: i32) -> (i32, i32) {
    %c0_i32 = arith.constant 0 : i32
    %c0_i32_0 = arith.constant 0 : i32
    return %arg0, %c0_i32 : i32, i32
  }
}

module attributes {stable_mosaic.version = 11 : i64} {
  func.func @fc_fused_kernel(%arg0: i32, %arg1: memref<2x512xf32, #tpu.memory_space<vmem>>, %arg2: memref<512x512xf32, #tpu.memory_space<vmem>>, %arg3: memref<1x512xf32, #tpu.memory_space<vmem>>, %arg4: memref<512x128xf32, #tpu.memory_space<vmem>>, %arg5: memref<1x128xf32, #tpu.memory_space<vmem>>, %arg6: memref<1x128xf32, #tpu.memory_space<vmem>>, %arg7: memref<1x1xf32, #tpu.memory_space<vmem>>, %arg8: memref<2x1xf32, #tpu.memory_space<vmem>>) attributes {dimension_semantics = [#tpu.dimension_semantics<arbitrary>], iteration_bounds = array<i64: 1>, scalar_prefetch = 0 : i64, scratch_operands = 0 : i64, tpu.core_type = #tpu.core_type<tc>, window_params = [{pipeline_mode = #tpu.pipeline_mode<synchronous>, transform_indices = @transform_0, window_bounds = array<i64: 2, 512>}, {pipeline_mode = #tpu.pipeline_mode<synchronous>, transform_indices = @transform_1, window_bounds = array<i64: 512, 512>}, {pipeline_mode = #tpu.pipeline_mode<synchronous>, transform_indices = @transform_2, window_bounds = array<i64: 1, 512>}, {pipeline_mode = #tpu.pipeline_mode<synchronous>, transform_indices = @transform_3, window_bounds = array<i64: 512, 128>}, {pipeline_mode = #tpu.pipeline_mode<synchronous>, transform_indices = @transform_4, window_bounds = array<i64: 1, 128>}, {pipeline_mode = #tpu.pipeline_mode<synchronous>, transform_indices = @transform_5, window_bounds = array<i64: 1, 128>}, {pipeline_mode = #tpu.pipeline_mode<synchronous>, transform_indices = @transform_6, window_bounds = array<i64: 1, 1>}, {pipeline_mode = #tpu.pipeline_mode<synchronous>, transform_indices = @transform_7, window_bounds = array<i64: 2, 1>}]} {
    %c0 = arith.constant 0 : index
    %c0_0 = arith.constant 0 : index
    %0 = vector.load %arg1[%c0, %c0_0] : memref<2x512xf32, #tpu.memory_space<vmem>>, vector<2x512xf32>
    %c0_1 = arith.constant 0 : index
    %c0_2 = arith.constant 0 : index
    %1 = vector.load %arg2[%c0_1, %c0_2] : memref<512x512xf32, #tpu.memory_space<vmem>>, vector<512x512xf32>
    %cst = arith.constant dense<0.000000e+00> : vector<2x512xf32>
    %2 = tpu.matmul %0, %1, %cst {dimension_numbers = #tpu.dot_dimension_numbers<[1], [0], [0], [1], [0, 0, 1, 1], [], []>} : vector<2x512xf32>, vector<512x512xf32>, vector<2x512xf32> -> vector<2x512xf32>
    %c0_3 = arith.constant 0 : index
    %c0_4 = arith.constant 0 : index
    %3 = vector.load %arg3[%c0_3, %c0_4] : memref<1x512xf32, #tpu.memory_space<vmem>>, vector<1x512xf32>
    %4 = vector.broadcast %3 : vector<1x512xf32> to vector<2x512xf32>
    %5 = arith.addf %2, %4 : vector<2x512xf32>
    %cst_5 = arith.constant 0.000000e+00 : f32
    %6 = vector.broadcast %cst_5 : f32 to vector<2x512xf32>
    %7 = arith.maximumf %5, %6 : vector<2x512xf32>
    %c0_6 = arith.constant 0 : index
    %c0_7 = arith.constant 0 : index
    %8 = vector.load %arg4[%c0_6, %c0_7] : memref<512x128xf32, #tpu.memory_space<vmem>>, vector<512x128xf32>
    %cst_8 = arith.constant dense<0.000000e+00> : vector<2x128xf32>
    %9 = tpu.matmul %7, %8, %cst_8 {dimension_numbers = #tpu.dot_dimension_numbers<[1], [0], [0], [1], [0, 0, 1, 1], [], []>} : vector<2x512xf32>, vector<512x128xf32>, vector<2x128xf32> -> vector<2x128xf32>
    %c0_9 = arith.constant 0 : index
    %c0_10 = arith.constant 0 : index
    %10 = vector.load %arg5[%c0_9, %c0_10] : memref<1x128xf32, #tpu.memory_space<vmem>>, vector<1x128xf32>
    %11 = vector.broadcast %10 : vector<1x128xf32> to vector<2x128xf32>
    %12 = arith.addf %9, %11 : vector<2x128xf32>
    %cst_11 = arith.constant 0.000000e+00 : f32
    %13 = vector.broadcast %cst_11 : f32 to vector<2x128xf32>
    %14 = arith.maximumf %12, %13 : vector<2x128xf32>
    %c0_12 = arith.constant 0 : index
    %c0_13 = arith.constant 0 : index
    %15 = vector.load %arg6[%c0_12, %c0_13] : memref<1x128xf32, #tpu.memory_space<vmem>>, vector<1x128xf32>
    %16 = vector.broadcast %15 : vector<1x128xf32> to vector<2x128xf32>
    %17 = arith.mulf %14, %16 : vector<2x128xf32>
    %cst_14 = arith.constant dense<0.000000e+00> : vector<2xf32>
    %18 = vector.multi_reduction <add>, %17, %cst_14 [1] : vector<2x128xf32> to vector<2xf32>
    %19 = vector.shape_cast %18 : vector<2xf32> to vector<2x1xf32>
    %c0_15 = arith.constant 0 : index
    %c0_16 = arith.constant 0 : index
    %20 = vector.load %arg7[%c0_15, %c0_16] : memref<1x1xf32, #tpu.memory_space<vmem>>, vector<1x1xf32>
    %21 = vector.broadcast %20 : vector<1x1xf32> to vector<2x1xf32>
    %22 = arith.addf %19, %21 : vector<2x1xf32>
    %c0_17 = arith.constant 0 : index
    %c0_18 = arith.constant 0 : index
    %23 = vector.load %arg8[%c0_17, %c0_18] : memref<2x1xf32, #tpu.memory_space<vmem>>, vector<2x1xf32>
    tpu.vector_store %arg8[%c0_17, %c0_18], %22 {strides = array<i32>} : memref<2x1xf32, #tpu.memory_space<vmem>>, vector<2x1xf32>,
    return
  }
  func.func @transform_0(%arg0: i32) -> (i32, i32) {
    %c0_i32 = arith.constant 0 : i32
    %c0_i32_0 = arith.constant 0 : i32
    %c0_i32_1 = arith.constant 0 : i32
    return %c0_i32, %c0_i32_0 : i32, i32
  }
  func.func @transform_1(%arg0: i32) -> (i32, i32) {
    %c0_i32 = arith.constant 0 : i32
    %c0_i32_0 = arith.constant 0 : i32
    %c0_i32_1 = arith.constant 0 : i32
    return %c0_i32, %c0_i32_0 : i32, i32
  }
  func.func @transform_2(%arg0: i32) -> (i32, i32) {
    %c0_i32 = arith.constant 0 : i32
    %c0_i32_0 = arith.constant 0 : i32
    %c0_i32_1 = arith.constant 0 : i32
    return %c0_i32, %c0_i32_0 : i32, i32
  }
  func.func @transform_3(%arg0: i32) -> (i32, i32) {
    %c0_i32 = arith.constant 0 : i32
    %c0_i32_0 = arith.constant 0 : i32
    %c0_i32_1 = arith.constant 0 : i32
    return %c0_i32, %c0_i32_0 : i32, i32
  }
  func.func @transform_4(%arg0: i32) -> (i32, i32) {
    %c0_i32 = arith.constant 0 : i32
    %c0_i32_0 = arith.constant 0 : i32
    %c0_i32_1 = arith.constant 0 : i32
    return %c0_i32, %c0_i32_0 : i32, i32
  }
  func.func @transform_5(%arg0: i32) -> (i32, i32) {
    %c0_i32 = arith.constant 0 : i32
    %c0_i32_0 = arith.constant 0 : i32
    %c0_i32_1 = arith.constant 0 : i32
    return %c0_i32, %c0_i32_0 : i32, i32
  }
  func.func @transform_6(%arg0: i32) -> (i32, i32) {
    %c0_i32 = arith.constant 0 : i32
    %c0_i32_0 = arith.constant 0 : i32
    %c0_i32_1 = arith.constant 0 : i32
    return %c0_i32, %c0_i32_0 : i32, i32
  }
  func.func @transform_7(%arg0: i32) -> (i32, i32) {
    %c0_i32 = arith.constant 0 : i32
    %c0_i32_0 = arith.constant 0 : i32
    %c0_i32_1 = arith.constant 0 : i32
    return %c0_i32, %c0_i32_0 : i32, i32
  }
}

module attributes {stable_mosaic.version = 11 : i64} {
  func.func @conv_pool_relu_kernel(%arg0: i32, %arg1: memref<4x32x144xf32, #tpu.memory_space<vmem>>, %arg2: memref<144x32xf32, #tpu.memory_space<vmem>>, %arg3: memref<1x32xf32, #tpu.memory_space<vmem>>, %arg4: memref<32x32xf32, #tpu.memory_space<vmem>>) attributes {dimension_semantics = [#tpu.dimension_semantics<parallel>], iteration_bounds = array<i64: 1>, scalar_prefetch = 0 : i64, scratch_operands = 0 : i64, tpu.core_type = #tpu.core_type<tc>, window_params = [{transform_indices = @transform_0, window_bounds = array<i64: 4, 32, 144>}, {pipeline_mode = #tpu.pipeline_mode<synchronous>, transform_indices = @transform_1, window_bounds = array<i64: 144, 32>}, {pipeline_mode = #tpu.pipeline_mode<synchronous>, transform_indices = @transform_2, window_bounds = array<i64: 1, 32>}, {transform_indices = @transform_3, window_bounds = array<i64: 32, 32>}]} {
    %c0 = arith.constant 0 : index
    %c0_0 = arith.constant 0 : index
    %c0_1 = arith.constant 0 : index
    %0 = vector.load %arg1[%c0, %c0_0, %c0_1] : memref<4x32x144xf32, #tpu.memory_space<vmem>>, vector<4x32x144xf32>
    %1 = vector.shape_cast %0 : vector<4x32x144xf32> to vector<128x144xf32>
    %c0_2 = arith.constant 0 : index
    %c0_3 = arith.constant 0 : index
    %2 = vector.load %arg2[%c0_2, %c0_3] : memref<144x32xf32, #tpu.memory_space<vmem>>, vector<144x32xf32>
    %cst = arith.constant dense<0.000000e+00> : vector<128x32xf32>
    %3 = tpu.matmul %1, %2, %cst {dimension_numbers = #tpu.dot_dimension_numbers<[1], [0], [0], [1], [0, 0, 1, 1], [], []>} : vector<128x144xf32>, vector<144x32xf32>, vector<128x32xf32> -> vector<128x32xf32>
    %4 = vector.extract_strided_slice %3 {offsets = [0, 0], sizes = [32, 32], strides = [1, 1]} : vector<128x32xf32> to vector<32x32xf32>
    %5 = vector.extract_strided_slice %3 {offsets = [32, 0], sizes = [32, 32], strides = [1, 1]} : vector<128x32xf32> to vector<32x32xf32>
    %6 = arith.maximumf %4, %5 : vector<32x32xf32>
    %7 = vector.extract_strided_slice %3 {offsets = [64, 0], sizes = [32, 32], strides = [1, 1]} : vector<128x32xf32> to vector<32x32xf32>
    %8 = vector.extract_strided_slice %3 {offsets = [96, 0], sizes = [32, 32], strides = [1, 1]} : vector<128x32xf32> to vector<32x32xf32>
    %9 = arith.maximumf %7, %8 : vector<32x32xf32>
    %10 = arith.maximumf %6, %9 : vector<32x32xf32>
    %c0_4 = arith.constant 0 : index
    %c0_5 = arith.constant 0 : index
    %11 = vector.load %arg3[%c0_4, %c0_5] : memref<1x32xf32, #tpu.memory_space<vmem>>, vector<1x32xf32>
    %12 = vector.broadcast %11 : vector<1x32xf32> to vector<32x32xf32>
    %13 = arith.addf %10, %12 : vector<32x32xf32>
    %cst_6 = arith.constant 0.000000e+00 : f32
    %14 = vector.broadcast %cst_6 : f32 to vector<32x32xf32>
    %15 = arith.maximumf %13, %14 : vector<32x32xf32>
    %c0_7 = arith.constant 0 : index
    %c0_8 = arith.constant 0 : index
    %16 = vector.load %arg4[%c0_7, %c0_8] : memref<32x32xf32, #tpu.memory_space<vmem>>, vector<32x32xf32>
    tpu.vector_store %arg4[%c0_7, %c0_8], %15 {strides = array<i32>} : memref<32x32xf32, #tpu.memory_space<vmem>>, vector<32x32xf32>,
    return
  }
  func.func @transform_0(%arg0: i32) -> (i32, i32, i32) {
    %c0_i32 = arith.constant 0 : i32
    %c0_i32_0 = arith.constant 0 : i32
    %c0_i32_1 = arith.constant 0 : i32
    return %c0_i32, %arg0, %c0_i32_0 : i32, i32, i32
  }
  func.func @transform_1(%arg0: i32) -> (i32, i32) {
    %c0_i32 = arith.constant 0 : i32
    %c0_i32_0 = arith.constant 0 : i32
    %c0_i32_1 = arith.constant 0 : i32
    return %c0_i32, %c0_i32_0 : i32, i32
  }
  func.func @transform_2(%arg0: i32) -> (i32, i32) {
    %c0_i32 = arith.constant 0 : i32
    %c0_i32_0 = arith.constant 0 : i32
    %c0_i32_1 = arith.constant 0 : i32
    return %c0_i32, %c0_i32_0 : i32, i32
  }
  func.func @transform_3(%arg0: i32) -> (i32, i32) {
    %c0_i32 = arith.constant 0 : i32
    %c0_i32_0 = arith.constant 0 : i32
    return %arg0, %c0_i32 : i32, i32
  }
}

</mosaic_0001>

<llo_original>
// kernel: convnet2_forward.3
$region0: #{convnet2_forward.3}
  #allocation0 [shape = 'u32[]', space=smem, size = 0x4, offset = 0x4, fixed_abs, tag = 'smem constant byte address 0x4 - core index']
  #allocation1 [shape = 'u32[144,128]{1,0:T(1,128)}', space=vmem, size = 0x12000, scoped, tag = 'internal scratch']
  %s0 = inlined_call_operand.vmem [shape: f32[4,128,36], index: 0, kind: input, shape index: {}]
  %s1 = inlined_call_operand.vmem [shape: f32[36,16], index: 1, kind: input, shape index: {}]
  %s2 = inlined_call_operand.vmem [shape: f32[1,16], index: 2, kind: input, shape index: {}]
  %s3 = inlined_call_operand.vmem [shape: f32[128,16], index: 3, kind: output, shape index: {}]
  %s4 = sld [smem:[#allocation0]]
  $region22: #{convnet2_forward.3} parent=0
    _
  %s6 = ssub.s32 1, %s4
  %s7 = scalar_select 0, %s6, %s4
  // Predicated region
  $region2: #{convnet2_forward.3} parent=0 // pred_check
    _
  $region3: #{convnet2_forward.3} parent=0 // pred_check_branch
    %9 = sbr.rel (0) target = $region5
  $region4: #{convnet2_forward.3} parent=0 // pred_region
    _
  $region5: #{convnet2_forward.3} parent=0 // pred_fallthru
    _
  // Predicated region
  $region6: #{convnet2_forward.3} parent=0 // pred_check
    _
  $region7: #{convnet2_forward.3} parent=0 // pred_check_branch
    %11 = sbr.rel (0) target = $region9
  $region8: #{convnet2_forward.3} parent=0 // pred_region
    _
  $region9: #{convnet2_forward.3} parent=0 // pred_fallthru
    _
  // Predicated region
  $region10: #{convnet2_forward.3} parent=0 // pred_check
    _
  $region11: #{convnet2_forward.3} parent=0 // pred_check_branch
    %13 = sbr.rel (0) target = $region13
  $region12: #{convnet2_forward.3} parent=0 // pred_region
    _
  $region13: #{convnet2_forward.3} parent=0 // pred_fallthru
    _
  %v14 = vld [vmem:[%s0] sm:$0xff]
  %v15 = vld [vmem:[%s0 + $0x8] sm:$0xff]
  %v16 = vld [vmem:[%s0 + $0x10] sm:$0xff]
  %v17 = vld [vmem:[%s0 + $0x18] sm:$0xff]
  %v18 = vld [vmem:[%s0 + $0x20] sm:$0xff]
  %v19 = vld [vmem:[%s0 + $0x28] sm:$0xff]
  %v20 = vld [vmem:[%s0 + $0x30] sm:$0xff]
  %v21 = vld [vmem:[%s0 + $0x38] sm:$0xff]
  %v22 = vld [vmem:[%s0 + $0x40] sm:$0xff]
  %v23 = vld [vmem:[%s0 + $0x48] sm:$0xff]
  %v24 = vld [vmem:[%s0 + $0x50] sm:$0xff]
  %v25 = vld [vmem:[%s0 + $0x58] sm:$0xff]
  %v26 = vld [vmem:[%s0 + $0x60] sm:$0xff]
  %v27 = vld [vmem:[%s0 + $0x68] sm:$0xff]
  %v28 = vld [vmem:[%s0 + $0x70] sm:$0xff]
  %v29 = vld [vmem:[%s0 + $0x78] sm:$0xff]
  %v30 = vld [vmem:[%s0 + $0x80] sm:$0xff]
  %v31 = vld [vmem:[%s0 + $0x88] sm:$0xff]
  %v32 = vld [vmem:[%s0 + $0x90] sm:$0xff]
  %v33 = vld [vmem:[%s0 + $0x98] sm:$0xff]
  %v34 = vld [vmem:[%s0 + $0xa0] sm:$0xff]
  %v35 = vld [vmem:[%s0 + $0xa8] sm:$0xff]
  %v36 = vld [vmem:[%s0 + $0xb0] sm:$0xff]
  %v37 = vld [vmem:[%s0 + $0xb8] sm:$0xff]
  %v38 = vld [vmem:[%s0 + $0xc0] sm:$0xff]
  %v39 = vld [vmem:[%s0 + $0xc8] sm:$0xff]
  %v40 = vld [vmem:[%s0 + $0xd0] sm:$0xff]
  %v41 = vld [vmem:[%s0 + $0xd8] sm:$0xff]
  %v42 = vld [vmem:[%s0 + $0xe0] sm:$0xff]
  %v43 = vld [vmem:[%s0 + $0xe8] sm:$0xff]
  %v44 = vld [vmem:[%s0 + $0xf0] sm:$0xff]
  %v45 = vld [vmem:[%s0 + $0xf8] sm:$0xff]
  %v46 = vld [vmem:[%s0 + $0x100] sm:$0xff]
  %v47 = vld [vmem:[%s0 + $0x108] sm:$0xff]
  %v48 = vld [vmem:[%s0 + $0x110] sm:$0xff]
  %v49 = vld [vmem:[%s0 + $0x118] sm:$0xff]
  %v50 = vld [vmem:[%s0 + $0x120] sm:$0xff]
  %v51 = vld [vmem:[%s0 + $0x128] sm:$0xff]
  %v52 = vld [vmem:[%s0 + $0x130] sm:$0xff]
  %v53 = vld [vmem:[%s0 + $0x138] sm:$0xff]
  %v54 = vld [vmem:[%s0 + $0x140] sm:$0xff]
  %v55 = vld [vmem:[%s0 + $0x148] sm:$0xff]
  %v56 = vld [vmem:[%s0 + $0x150] sm:$0xff]
  %v57 = vld [vmem:[%s0 + $0x158] sm:$0xff]
  %v58 = vld [vmem:[%s0 + $0x160] sm:$0xff]
  %v59 = vld [vmem:[%s0 + $0x168] sm:$0xff]
  %v60 = vld [vmem:[%s0 + $0x170] sm:$0xff]
  %v61 = vld [vmem:[%s0 + $0x178] sm:$0xff]
  %v62 = vld [vmem:[%s0 + $0x180] sm:$0xff]
  %v63 = vld [vmem:[%s0 + $0x188] sm:$0xff]
  %v64 = vld [vmem:[%s0 + $0x190] sm:$0xff]
  %v65 = vld [vmem:[%s0 + $0x198] sm:$0xff]
  %v66 = vld [vmem:[%s0 + $0x1a0] sm:$0xff]
  %v67 = vld [vmem:[%s0 + $0x1a8] sm:$0xff]
  %v68 = vld [vmem:[%s0 + $0x1b0] sm:$0xff]
  %v69 = vld [vmem:[%s0 + $0x1b8] sm:$0xff]
  %v70 = vld [vmem:[%s0 + $0x1c0] sm:$0xff]
  %v71 = vld [vmem:[%s0 + $0x1c8] sm:$0xff]
  %v72 = vld [vmem:[%s0 + $0x1d0] sm:$0xff]
  %v73 = vld [vmem:[%s0 + $0x1d8] sm:$0xff]
  %v74 = vld [vmem:[%s0 + $0x1e0] sm:$0xff]
  %v75 = vld [vmem:[%s0 + $0x1e8] sm:$0xff]
  %v76 = vld [vmem:[%s0 + $0x1f0] sm:$0xff]
  %v77 = vld [vmem:[%s0 + $0x1f8] sm:$0xff]
  %v78 = vld [vmem:[%s1] sm:$0xff]
  %v79 = vld [vmem:[%s1 + $0x8] sm:$0xff]
  %v80 = vld [vmem:[%s1 + $0x10] sm:$0xff]
  %v81 = vld [vmem:[%s1 + $0x18] sm:$0xff]
  %v82 = vld [vmem:[%s1 + $0x20] sm:$0xf]
  %vm83 = vcmask 293888
  %v85 = vsel %vm83, %v14, 0
  %v88 = vsel %vm83, %v15, 0
  %v91 = vsel %vm83, %v16, 0
  %v94 = vsel %vm83, %v17, 0
  %v97 = vsel %vm83, %v18, 0
  %v100 = vsel %vm83, %v19, 0
  %v103 = vsel %vm83, %v20, 0
  %v106 = vsel %vm83, %v21, 0
  %v109 = vsel %vm83, %v22, 0
  %v112 = vsel %vm83, %v23, 0
  %v115 = vsel %vm83, %v24, 0
  %v118 = vsel %vm83, %v25, 0
  %v121 = vsel %vm83, %v26, 0
  %v124 = vsel %vm83, %v27, 0
  %v127 = vsel %vm83, %v28, 0
  %v130 = vsel %vm83, %v29, 0
  %v133 = vsel %vm83, %v30, 0
  %v136 = vsel %vm83, %v31, 0
  %v139 = vsel %vm83, %v32, 0
  %v142 = vsel %vm83, %v33, 0
  %v145 = vsel %vm83, %v34, 0
  %v148 = vsel %vm83, %v35, 0
  %v151 = vsel %vm83, %v36, 0
  %v154 = vsel %vm83, %v37, 0
  %v157 = vsel %vm83, %v38, 0
  %v160 = vsel %vm83, %v39, 0
  %v163 = vsel %vm83, %v40, 0
  %v166 = vsel %vm83, %v41, 0
  %v169 = vsel %vm83, %v42, 0
  %v172 = vsel %vm83, %v43, 0
  %v175 = vsel %vm83, %v44, 0
  %v178 = vsel %vm83, %v45, 0
  %v181 = vsel %vm83, %v46, 0
  %v184 = vsel %vm83, %v47, 0
  %v187 = vsel %vm83, %v48, 0
  %v190 = vsel %vm83, %v49, 0
  %v193 = vsel %vm83, %v50, 0
  %v196 = vsel %vm83, %v51, 0
  %v199 = vsel %vm83, %v52, 0
  %v202 = vsel %vm83, %v53, 0
  %v205 = vsel %vm83, %v54, 0
  %v208 = vsel %vm83, %v55, 0
  %v211 = vsel %vm83, %v56, 0
  %v214 = vsel %vm83, %v57, 0
  %v217 = vsel %vm83, %v58, 0
  %v220 = vsel %vm83, %v59, 0
  %v223 = vsel %vm83, %v60, 0
  %v226 = vsel %vm83, %v61, 0
  %v229 = vsel %vm83, %v62, 0
  %v232 = vsel %vm83, %v63, 0
  %v235 = vsel %vm83, %v64, 0
  %v238 = vsel %vm83, %v65, 0
  %v241 = vsel %vm83, %v66, 0
  %v244 = vsel %vm83, %v67, 0
  %v247 = vsel %vm83, %v68, 0
  %v250 = vsel %vm83, %v69, 0
  %v253 = vsel %vm83, %v70, 0
  %v256 = vsel %vm83, %v71, 0
  %v259 = vsel %vm83, %v72, 0
  %v262 = vsel %vm83, %v73, 0
  %v265 = vsel %vm83, %v74, 0
  %v268 = vsel %vm83, %v75, 0
  %v271 = vsel %vm83, %v76, 0
  %v274 = vsel %vm83, %v77, 0
  %vm276 = vcmask 1043456
  %v278 = vsel %vm276, %v82, 0
  %280 = vmatprep.subr.mxu0 0.0
  %281 = vmatpush1.msra.mxu0 %v78
  %282 = vmatprep.subr.mxu0 0.0
  %283 = vmatpush1.msra.mxu0 %v79
  %284 = vmatprep.subr.mxu0 0.0
  %285 = vmatpush1.msra.mxu0 %v80
  %286 = vmatprep.subr.mxu0 0.0
  %287 = vmatpush1.msra.mxu0 %v81
  %288 = vmatprep.subr.mxu0 0.0
  %289 = vmatpush1.msra.mxu0 %v278
  %290 = vmatprep.subr.mxu0 0.0
  %291 = vmatpush1.msra.mxu0 0.0
  %292 = vmatprep.subr.mxu0 0.0
  %293 = vmatpush1.msra.mxu0 0.0
  %294 = vmatprep.subr.mxu0 0.0
  %295 = vmatpush1.msra.mxu0 0.0
  %296 = vmatprep.subr.mxu0 0.0
  %297 = vmatpush1.msra.mxu0 0.0
  %298 = vmatprep.subr.mxu0 0.0
  %299 = vmatpush1.msra.mxu0 0.0
  %300 = vmatprep.subr.mxu0 0.0
  %301 = vmatpush1.msra.mxu0 0.0
  %302 = vmatprep.subr.mxu0 0.0
  %303 = vmatpush1.msra.mxu0 0.0
  %304 = vmatprep.subr.mxu0 0.0
  %305 = vmatpush1.msra.mxu0 0.0
  %306 = vmatprep.subr.mxu0 0.0
  %307 = vmatpush1.msra.mxu0 0.0
  %308 = vmatprep.subr.mxu0 0.0
  %309 = vmatpush1.msra.mxu0 0.0
  %310 = vmatprep.subr.mxu0 0.0
  %311 = vmatpush1.msra.mxu0 0.0
  %312 = vmatprep.subr.mxu0 0.0
  %313 = vmatpush1.msra.mxu0 0.0
  %314 = vmatprep.subr.mxu0 0.0
  %315 = vmatpush1.msra.mxu0 0.0
  %316 = vmatprep.subr.mxu0 0.0
  %317 = vmatpush1.msra.mxu0 0.0
  %318 = vmatprep.subr.mxu0 0.0
  %319 = vmatpush1.msra.mxu0 0.0
  %320 = vmatprep.subr.mxu0 0.0
  %321 = vmatpush1.msra.mxu0 0.0
  %322 = vmatprep.subr.mxu0 0.0
  %323 = vmatpush1.msra.mxu0 0.0
  %324 = vmatprep.subr.mxu0 0.0
  %325 = vmatpush1.msra.mxu0 0.0
  %326 = vmatprep.subr.mxu0 0.0
  %327 = vmatpush1.msra.mxu0 0.0
  %328 = vmatprep.subr.mxu0 0.0
  %329 = vmatpush1.msra.mxu0 0.0
  %330 = vmatprep.subr.mxu0 0.0
  %331 = vmatpush1.msra.mxu0 0.0
  %332 = vmatprep.subr.mxu0 0.0
  %333 = vmatpush1.msra.mxu0 0.0
  %334 = vmatprep.subr.mxu0 0.0
  %335 = vmatpush1.msra.mxu0 0.0
  %336 = vmatprep.subr.mxu0 0.0
  %337 = vmatpush1.msra.mxu0 0.0
  %338 = vmatprep.subr.mxu0 0.0
  %339 = vmatpush1.msra.mxu0 0.0
  %340 = vmatprep.subr.mxu0 0.0
  %341 = vmatpush1.msra.mxu0 0.0
  %342 = vmatprep.subr.mxu0 0.0
  %343 = vmatpush1.msra.mxu0 0.0
  %344 = vmatprep.mubr.f32.mxu0 0.0
  %345 = vmatmul.mubr.f32.gmra.mrb[0].mxu0 %v85
  %v346 = vpop.f32.mrb[0].mxu0
  %v347 = vadd.f32 0.0, %v346
  %v348 = vpop.f32.mrb[0].mxu0
  %349 = vmatprep.mubr.f32.mxu0 0.0
  %350 = vmatmul.mubr.f32.gmra.mrb[0].mxu0 %v88
  %v351 = vpop.f32.mrb[0].mxu0
  %v352 = vadd.f32 0.0, %v351
  %v353 = vpop.f32.mrb[0].mxu0
  %354 = vmatprep.mubr.f32.mxu0 0.0
  %355 = vmatmul.mubr.f32.gmra.mrb[0].mxu0 %v91
  %v356 = vpop.f32.mrb[0].mxu0
  %v357 = vadd.f32 0.0, %v356
  %v358 = vpop.f32.mrb[0].mxu0
  %359 = vmatprep.mubr.f32.mxu0 0.0
  %360 = vmatmul.mubr.f32.gmra.mrb[0].mxu0 %v94
  %v361 = vpop.f32.mrb[0].mxu0
  %v362 = vadd.f32 0.0, %v361
  %v363 = vpop.f32.mrb[0].mxu0
  %364 = vmatprep.mubr.f32.mxu0 0.0
  %365 = vmatmul.mubr.f32.gmra.mrb[0].mxu0 %v97
  %v366 = vpop.f32.mrb[0].mxu0
  %v367 = vadd.f32 0.0, %v366
  %v368 = vpop.f32.mrb[0].mxu0
  %369 = vmatprep.mubr.f32.mxu0 0.0
  %370 = vmatmul.mubr.f32.gmra.mrb[0].mxu0 %v100
  %v371 = vpop.f32.mrb[0].mxu0
  %v372 = vadd.f32 0.0, %v371
  %v373 = vpop.f32.mrb[0].mxu0
  %374 = vmatprep.mubr.f32.mxu0 0.0
  %375 = vmatmul.mubr.f32.gmra.mrb[0].mxu0 %v103
  %v376 = vpop.f32.mrb[0].mxu0
  %v377 = vadd.f32 0.0, %v376
  %v378 = vpop.f32.mrb[0].mxu0
  %379 = vmatprep.mubr.f32.mxu0 0.0
  %380 = vmatmul.mubr.f32.gmra.mrb[0].mxu0 %v106
  %v381 = vpop.f32.mrb[0].mxu0
  %v382 = vadd.f32 0.0, %v381
  %v383 = vpop.f32.mrb[0].mxu0
  %384 = vmatprep.mubr.f32.mxu0 0.0
  %385 = vmatmul.mubr.f32.gmra.mrb[0].mxu0 %v109
  %v386 = vpop.f32.mrb[0].mxu0
  %v387 = vadd.f32 0.0, %v386
  %v388 = vpop.f32.mrb[0].mxu0
  %389 = vmatprep.mubr.f32.mxu0 0.0
  %390 = vmatmul.mubr.f32.gmra.mrb[0].mxu0 %v112
  %v391 = vpop.f32.mrb[0].mxu0
  %v392 = vadd.f32 0.0, %v391
  %v393 = vpop.f32.mrb[0].mxu0
  %394 = vmatprep.mubr.f32.mxu0 0.0
  %395 = vmatmul.mubr.f32.gmra.mrb[0].mxu0 %v115
  %v396 = vpop.f32.mrb[0].mxu0
  %v397 = vadd.f32 0.0, %v396
  %v398 = vpop.f32.mrb[0].mxu0
  %399 = vmatprep.mubr.f32.mxu0 0.0
  %400 = vmatmul.mubr.f32.gmra.mrb[0].mxu0 %v118
  %v401 = vpop.f32.mrb[0].mxu0
  %v402 = vadd.f32 0.0, %v401
  %v403 = vpop.f32.mrb[0].mxu0
  %404 = vmatprep.mubr.f32.mxu0 0.0
  %405 = vmatmul.mubr.f32.gmra.mrb[0].mxu0 %v121
  %v406 = vpop.f32.mrb[0].mxu0
  %v407 = vadd.f32 0.0, %v406
  %v408 = vpop.f32.mrb[0].mxu0
  %409 = vmatprep.mubr.f32.mxu0 0.0
  %410 = vmatmul.mubr.f32.gmra.mrb[0].mxu0 %v124
  %v411 = vpop.f32.mrb[0].mxu0
  %v412 = vadd.f32 0.0, %v411
  %v413 = vpop.f32.mrb[0].mxu0
  %414 = vmatprep.mubr.f32.mxu0 0.0
  %415 = vmatmul.mubr.f32.gmra.mrb[0].mxu0 %v127
  %v416 = vpop.f32.mrb[0].mxu0
  %v417 = vadd.f32 0.0, %v416
  %v418 = vpop.f32.mrb[0].mxu0
  %419 = vmatprep.mubr.f32.mxu0 0.0
  %420 = vmatmul.mubr.f32.gmra.mrb[0].mxu0 %v130
  %v421 = vpop.f32.mrb[0].mxu0
  %v422 = vadd.f32 0.0, %v421
  %v423 = vpop.f32.mrb[0].mxu0
  %424 = vmatprep.mubr.f32.mxu0 0.0
  %425 = vmatmul.mubr.f32.gmra.mrb[0].mxu0 %v133
  %v426 = vpop.f32.mrb[0].mxu0
  %v427 = vadd.f32 0.0, %v426
  %v428 = vpop.f32.mrb[0].mxu0
  %429 = vmatprep.mubr.f32.mxu0 0.0
  %430 = vmatmul.mubr.f32.gmra.mrb[0].mxu0 %v136
  %v431 = vpop.f32.mrb[0].mxu0
  %v432 = vadd.f32 0.0, %v431
  %v433 = vpop.f32.mrb[0].mxu0
  %434 = vmatprep.mubr.f32.mxu0 0.0
  %435 = vmatmul.mubr.f32.gmra.mrb[0].mxu0 %v139
  %v436 = vpop.f32.mrb[0].mxu0
  %v437 = vadd.f32 0.0, %v436
  %v438 = vpop.f32.mrb[0].mxu0
  %439 = vmatprep.mubr.f32.mxu0 0.0
  %440 = vmatmul.mubr.f32.gmra.mrb[0].mxu0 %v142
  %v441 = vpop.f32.mrb[0].mxu0
  %v442 = vadd.f32 0.0, %v441
  %v443 = vpop.f32.mrb[0].mxu0
  %444 = vmatprep.mubr.f32.mxu0 0.0
  %445 = vmatmul.mubr.f32.gmra.mrb[0].mxu0 %v145
  %v446 = vpop.f32.mrb[0].mxu0
  %v447 = vadd.f32 0.0, %v446
  %v448 = vpop.f32.mrb[0].mxu0
  %449 = vmatprep.mubr.f32.mxu0 0.0
  %450 = vmatmul.mubr.f32.gmra.mrb[0].mxu0 %v148
  %v451 = vpop.f32.mrb[0].mxu0
  %v452 = vadd.f32 0.0, %v451
  %v453 = vpop.f32.mrb[0].mxu0
  %454 = vmatprep.mubr.f32.mxu0 0.0
  %455 = vmatmul.mubr.f32.gmra.mrb[0].mxu0 %v151
  %v456 = vpop.f32.mrb[0].mxu0
  %v457 = vadd.f32 0.0, %v456
  %v458 = vpop.f32.mrb[0].mxu0
  %459 = vmatprep.mubr.f32.mxu0 0.0
  %460 = vmatmul.mubr.f32.gmra.mrb[0].mxu0 %v154
  %v461 = vpop.f32.mrb[0].mxu0
  %v462 = vadd.f32 0.0, %v461
  %v463 = vpop.f32.mrb[0].mxu0
  %464 = vmatprep.mubr.f32.mxu0 0.0
  %465 = vmatmul.mubr.f32.gmra.mrb[0].mxu0 %v157
  %v466 = vpop.f32.mrb[0].mxu0
  %v467 = vadd.f32 0.0, %v466
  %v468 = vpop.f32.mrb[0].mxu0
  %469 = vmatprep.mubr.f32.mxu0 0.0
  %470 = vmatmul.mubr.f32.gmra.mrb[0].mxu0 %v160
  %v471 = vpop.f32.mrb[0].mxu0
  %v472 = vadd.f32 0.0, %v471
  %v473 = vpop.f32.mrb[0].mxu0
  %474 = vmatprep.mubr.f32.mxu0 0.0
  %475 = vmatmul.mubr.f32.gmra.mrb[0].mxu0 %v163
  %v476 = vpop.f32.mrb[0].mxu0
  %v477 = vadd.f32 0.0, %v476
  %v478 = vpop.f32.mrb[0].mxu0
  %479 = vmatprep.mubr.f32.mxu0 0.0
  %480 = vmatmul.mubr.f32.gmra.mrb[0].mxu0 %v166
  %v481 = vpop.f32.mrb[0].mxu0
  %v482 = vadd.f32 0.0, %v481
  %v483 = vpop.f32.mrb[0].mxu0
  %484 = vmatprep.mubr.f32.mxu0 0.0
  %485 = vmatmul.mubr.f32.gmra.mrb[0].mxu0 %v169
  %v486 = vpop.f32.mrb[0].mxu0
  %v487 = vadd.f32 0.0, %v486
  %v488 = vpop.f32.mrb[0].mxu0
  %489 = vmatprep.mubr.f32.mxu0 0.0
  %490 = vmatmul.mubr.f32.gmra.mrb[0].mxu0 %v172
  %v491 = vpop.f32.mrb[0].mxu0
  %v492 = vadd.f32 0.0, %v491
  %v493 = vpop.f32.mrb[0].mxu0
  %494 = vmatprep.mubr.f32.mxu0 0.0
  %495 = vmatmul.mubr.f32.gmra.mrb[0].mxu0 %v175
  %v496 = vpop.f32.mrb[0].mxu0
  %v497 = vadd.f32 0.0, %v496
  %v498 = vpop.f32.mrb[0].mxu0
  %499 = vmatprep.mubr.f32.mxu0 0.0
  %500 = vmatmul.mubr.f32.gmra.mrb[0].mxu0 %v178
  %v501 = vpop.f32.mrb[0].mxu0
  %v502 = vadd.f32 0.0, %v501
  %v503 = vpop.f32.mrb[0].mxu0
  %504 = vmatprep.mubr.f32.mxu0 0.0
  %505 = vmatmul.mubr.f32.gmra.mrb[0].mxu0 %v181
  %v506 = vpop.f32.mrb[0].mxu0
  %v507 = vadd.f32 0.0, %v506
  %v508 = vpop.f32.mrb[0].mxu0
  %509 = vmatprep.mubr.f32.mxu0 0.0
  %510 = vmatmul.mubr.f32.gmra.mrb[0].mxu0 %v184
  %v511 = vpop.f32.mrb[0].mxu0
  %v512 = vadd.f32 0.0, %v511
  %v513 = vpop.f32.mrb[0].mxu0
  %514 = vmatprep.mubr.f32.mxu0 0.0
  %515 = vmatmul.mubr.f32.gmra.mrb[0].mxu0 %v187
  %v516 = vpop.f32.mrb[0].mxu0
  %v517 = vadd.f32 0.0, %v516
  %v518 = vpop.f32.mrb[0].mxu0
  %519 = vmatprep.mubr.f32.mxu0 0.0
  %520 = vmatmul.mubr.f32.gmra.mrb[0].mxu0 %v190
  %v521 = vpop.f32.mrb[0].mxu0
  %v522 = vadd.f32 0.0, %v521
  %v523 = vpop.f32.mrb[0].mxu0
  %524 = vmatprep.mubr.f32.mxu0 0.0
  %525 = vmatmul.mubr.f32.gmra.mrb[0].mxu0 %v193
  %v526 = vpop.f32.mrb[0].mxu0
  %v527 = vadd.f32 0.0, %v526
  %v528 = vpop.f32.mrb[0].mxu0
  %529 = vmatprep.mubr.f32.mxu0 0.0
  %530 = vmatmul.mubr.f32.gmra.mrb[0].mxu0 %v196
  %v531 = vpop.f32.mrb[0].mxu0
  %v532 = vadd.f32 0.0, %v531
  %v533 = vpop.f32.mrb[0].mxu0
  %534 = vmatprep.mubr.f32.mxu0 0.0
  %535 = vmatmul.mubr.f32.gmra.mrb[0].mxu0 %v199
  %v536 = vpop.f32.mrb[0].mxu0
  %v537 = vadd.f32 0.0, %v536
  %v538 = vpop.f32.mrb[0].mxu0
  %539 = vmatprep.mubr.f32.mxu0 0.0
  %540 = vmatmul.mubr.f32.gmra.mrb[0].mxu0 %v202
  %v541 = vpop.f32.mrb[0].mxu0
  %v542 = vadd.f32 0.0, %v541
  %v543 = vpop.f32.mrb[0].mxu0
  %544 = vmatprep.mubr.f32.mxu0 0.0
  %545 = vmatmul.mubr.f32.gmra.mrb[0].mxu0 %v205
  %v546 = vpop.f32.mrb[0].mxu0
  %v547 = vadd.f32 0.0, %v546
  %v548 = vpop.f32.mrb[0].mxu0
  %549 = vmatprep.mubr.f32.mxu0 0.0
  %550 = vmatmul.mubr.f32.gmra.mrb[0].mxu0 %v208
  %v551 = vpop.f32.mrb[0].mxu0
  %v552 = vadd.f32 0.0, %v551
  %v553 = vpop.f32.mrb[0].mxu0
  %554 = vmatprep.mubr.f32.mxu0 0.0
  %555 = vmatmul.mubr.f32.gmra.mrb[0].mxu0 %v211
  %v556 = vpop.f32.mrb[0].mxu0
  %v557 = vadd.f32 0.0, %v556
  %v558 = vpop.f32.mrb[0].mxu0
  %559 = vmatprep.mubr.f32.mxu0 0.0
  %560 = vmatmul.mubr.f32.gmra.mrb[0].mxu0 %v214
  %v561 = vpop.f32.mrb[0].mxu0
  %v562 = vadd.f32 0.0, %v561
  %v563 = vpop.f32.mrb[0].mxu0
  %564 = vmatprep.mubr.f32.mxu0 0.0
  %565 = vmatmul.mubr.f32.gmra.mrb[0].mxu0 %v217
  %v566 = vpop.f32.mrb[0].mxu0
  %v567 = vadd.f32 0.0, %v566
  %v568 = vpop.f32.mrb[0].mxu0
  %569 = vmatprep.mubr.f32.mxu0 0.0
  %570 = vmatmul.mubr.f32.gmra.mrb[0].mxu0 %v220
  %v571 = vpop.f32.mrb[0].mxu0
  %v572 = vadd.f32 0.0, %v571
  %v573 = vpop.f32.mrb[0].mxu0
  %574 = vmatprep.mubr.f32.mxu0 0.0
  %575 = vmatmul.mubr.f32.gmra.mrb[0].mxu0 %v223
  %v576 = vpop.f32.mrb[0].mxu0
  %v577 = vadd.f32 0.0, %v576
  %v578 = vpop.f32.mrb[0].mxu0
  %579 = vmatprep.mubr.f32.mxu0 0.0
  %580 = vmatmul.mubr.f32.gmra.mrb[0].mxu0 %v226
  %v581 = vpop.f32.mrb[0].mxu0
  %v582 = vadd.f32 0.0, %v581
  %v583 = vpop.f32.mrb[0].mxu0
  %584 = vmatprep.mubr.f32.mxu0 0.0
  %585 = vmatmul.mubr.f32.gmra.mrb[0].mxu0 %v229
  %v586 = vpop.f32.mrb[0].mxu0
  %v587 = vadd.f32 0.0, %v586
  %v588 = vpop.f32.mrb[0].mxu0
  %589 = vmatprep.mubr.f32.mxu0 0.0
  %590 = vmatmul.mubr.f32.gmra.mrb[0].mxu0 %v232
  %v591 = vpop.f32.mrb[0].mxu0
  %v592 = vadd.f32 0.0, %v591
  %v593 = vpop.f32.mrb[0].mxu0
  %594 = vmatprep.mubr.f32.mxu0 0.0
  %595 = vmatmul.mubr.f32.gmra.mrb[0].mxu0 %v235
  %v596 = vpop.f32.mrb[0].mxu0
  %v597 = vadd.f32 0.0, %v596
  %v598 = vpop.f32.mrb[0].mxu0
  %599 = vmatprep.mubr.f32.mxu0 0.0
  %600 = vmatmul.mubr.f32.gmra.mrb[0].mxu0 %v238
  %v601 = vpop.f32.mrb[0].mxu0
  %v602 = vadd.f32 0.0, %v601
  %v603 = vpop.f32.mrb[0].mxu0
  %604 = vmatprep.mubr.f32.mxu0 0.0
  %605 = vmatmul.mubr.f32.gmra.mrb[0].mxu0 %v241
  %v606 = vpop.f32.mrb[0].mxu0
  %v607 = vadd.f32 0.0, %v606
  %v608 = vpop.f32.mrb[0].mxu0
  %609 = vmatprep.mubr.f32.mxu0 0.0
  %610 = vmatmul.mubr.f32.gmra.mrb[0].mxu0 %v244
  %v611 = vpop.f32.mrb[0].mxu0
  %v612 = vadd.f32 0.0, %v611
  %v613 = vpop.f32.mrb[0].mxu0
  %614 = vmatprep.mubr.f32.mxu0 0.0
  %615 = vmatmul.mubr.f32.gmra.mrb[0].mxu0 %v247
  %v616 = vpop.f32.mrb[0].mxu0
  %v617 = vadd.f32 0.0, %v616
  %v618 = vpop.f32.mrb[0].mxu0
  %619 = vmatprep.mubr.f32.mxu0 0.0
  %620 = vmatmul.mubr.f32.gmra.mrb[0].mxu0 %v250
  %v621 = vpop.f32.mrb[0].mxu0
  %v622 = vadd.f32 0.0, %v621
  %v623 = vpop.f32.mrb[0].mxu0
  %624 = vmatprep.mubr.f32.mxu0 0.0
  %625 = vmatmul.mubr.f32.gmra.mrb[0].mxu0 %v253
  %v626 = vpop.f32.mrb[0].mxu0
  %v627 = vadd.f32 0.0, %v626
  %v628 = vpop.f32.mrb[0].mxu0
  %629 = vmatprep.mubr.f32.mxu0 0.0
  %630 = vmatmul.mubr.f32.gmra.mrb[0].mxu0 %v256
  %v631 = vpop.f32.mrb[0].mxu0
  %v632 = vadd.f32 0.0, %v631
  %v633 = vpop.f32.mrb[0].mxu0
  %634 = vmatprep.mubr.f32.mxu0 0.0
  %635 = vmatmul.mubr.f32.gmra.mrb[0].mxu0 %v259
  %v636 = vpop.f32.mrb[0].mxu0
  %v637 = vadd.f32 0.0, %v636
  %v638 = vpop.f32.mrb[0].mxu0
  %639 = vmatprep.mubr.f32.mxu0 0.0
  %640 = vmatmul.mubr.f32.gmra.mrb[0].mxu0 %v262
  %v641 = vpop.f32.mrb[0].mxu0
  %v642 = vadd.f32 0.0, %v641
  %v643 = vpop.f32.mrb[0].mxu0
  %644 = vmatprep.mubr.f32.mxu0 0.0
  %645 = vmatmul.mubr.f32.gmra.mrb[0].mxu0 %v265
  %v646 = vpop.f32.mrb[0].mxu0
  %v647 = vadd.f32 0.0, %v646
  %v648 = vpop.f32.mrb[0].mxu0
  %649 = vmatprep.mubr.f32.mxu0 0.0
  %650 = vmatmul.mubr.f32.gmra.mrb[0].mxu0 %v268
  %v651 = vpop.f32.mrb[0].mxu0
  %v652 = vadd.f32 0.0, %v651
  %v653 = vpop.f32.mrb[0].mxu0
  %654 = vmatprep.mubr.f32.mxu0 0.0
  %655 = vmatmul.mubr.f32.gmra.mrb[0].mxu0 %v271
  %v656 = vpop.f32.mrb[0].mxu0
  %v657 = vadd.f32 0.0, %v656
  %v658 = vpop.f32.mrb[0].mxu0
  %659 = vmatprep.mubr.f32.mxu0 0.0
  %660 = vmatmul.mubr.f32.gmra.mrb[0].mxu0 %v274
  %v661 = vpop.f32.mrb[0].mxu0
  %v662 = vadd.f32 0.0, %v661
  %v663 = vpop.f32.mrb[0].mxu0
  %664 = vdwg.mxu0
  %v665 = vmax.f32 %v347, %v427
  %v666 = vmax.f32 %v352, %v432
  %v667 = vmax.f32 %v357, %v437
  %v668 = vmax.f32 %v362, %v442
  %v669 = vmax.f32 %v367, %v447
  %v670 = vmax.f32 %v372, %v452
  %v671 = vmax.f32 %v377, %v457
  %v672 = vmax.f32 %v382, %v462
  %v673 = vmax.f32 %v387, %v467
  %v674 = vmax.f32 %v392, %v472
  %v675 = vmax.f32 %v397, %v477
  %v676 = vmax.f32 %v402, %v482
  %v677 = vmax.f32 %v407, %v487
  %v678 = vmax.f32 %v412, %v492
  %v679 = vmax.f32 %v417, %v497
  %v680 = vmax.f32 %v422, %v502
  %v681 = vmax.f32 %v507, %v587
  %v682 = vmax.f32 %v512, %v592
  %v683 = vmax.f32 %v517, %v597
  %v684 = vmax.f32 %v522, %v602
  %v685 = vmax.f32 %v527, %v607
  %v686 = vmax.f32 %v532, %v612
  %v687 = vmax.f32 %v537, %v617
  %v688 = vmax.f32 %v542, %v622
  %v689 = vmax.f32 %v547, %v627
  %v690 = vmax.f32 %v552, %v632
  %v691 = vmax.f32 %v557, %v637
  %v692 = vmax.f32 %v562, %v642
  %v693 = vmax.f32 %v567, %v647
  %v694 = vmax.f32 %v572, %v652
  %v695 = vmax.f32 %v577, %v657
  %v696 = vmax.f32 %v582, %v662
  %v697 = vmax.f32 %v665, %v681
  %v698 = vmax.f32 %v666, %v682
  %v699 = vmax.f32 %v667, %v683
  %v700 = vmax.f32 %v668, %v684
  %v701 = vmax.f32 %v669, %v685
  %v702 = vmax.f32 %v670, %v686
  %v703 = vmax.f32 %v671, %v687
  %v704 = vmax.f32 %v672, %v688
  %v705 = vmax.f32 %v673, %v689
  %v706 = vmax.f32 %v674, %v690
  %v707 = vmax.f32 %v675, %v691
  %v708 = vmax.f32 %v676, %v692
  %v709 = vmax.f32 %v677, %v693
  %v710 = vmax.f32 %v678, %v694
  %v711 = vmax.f32 %v679, %v695
  %v712 = vmax.f32 %v680, %v696
  %v713 = vld [vmem:[%s2] sm:$0x1]
  %v715 = vlaneseq
  %v716 = vshrl.u32 %v715, 7
  %v717 = vsub.s32 0, %v716
  %v718 = vrot.slane %v713, %v717
  %v720 = vadd.f32 %v697, %v718
  %v721 = vadd.f32 %v698, %v718
  %v722 = vadd.f32 %v699, %v718
  %v723 = vadd.f32 %v700, %v718
  %v724 = vadd.f32 %v701, %v718
  %v725 = vadd.f32 %v702, %v718
  %v726 = vadd.f32 %v703, %v718
  %v727 = vadd.f32 %v704, %v718
  %v728 = vadd.f32 %v705, %v718
  %v729 = vadd.f32 %v706, %v718
  %v730 = vadd.f32 %v707, %v718
  %v731 = vadd.f32 %v708, %v718
  %v732 = vadd.f32 %v709, %v718
  %v733 = vadd.f32 %v710, %v718
  %v734 = vadd.f32 %v711, %v718
  %v735 = vadd.f32 %v712, %v718
  %v736 = vmax.f32 %v720, 0.0
  %v737 = vmax.f32 %v721, 0.0
  %v738 = vmax.f32 %v722, 0.0
  %v739 = vmax.f32 %v723, 0.0
  %v740 = vmax.f32 %v724, 0.0
  %v741 = vmax.f32 %v725, 0.0
  %v742 = vmax.f32 %v726, 0.0
  %v743 = vmax.f32 %v727, 0.0
  %v744 = vmax.f32 %v728, 0.0
  %v745 = vmax.f32 %v729, 0.0
  %v746 = vmax.f32 %v730, 0.0
  %v747 = vmax.f32 %v731, 0.0
  %v748 = vmax.f32 %v732, 0.0
  %v749 = vmax.f32 %v733, 0.0
  %v750 = vmax.f32 %v734, 0.0
  %v751 = vmax.f32 %v735, 0.0
  %vm752 = vcmask 130048
  %753 = vst.msk [vmem:[%s3] sm:$0xff] %vm752, %v736
  %754 = vst.msk [vmem:[%s3 + $0x8] sm:$0xff] %vm752, %v737
  %755 = vst.msk [vmem:[%s3 + $0x10] sm:$0xff] %vm752, %v738
  %756 = vst.msk [vmem:[%s3 + $0x18] sm:$0xff] %vm752, %v739
  %757 = vst.msk [vmem:[%s3 + $0x20] sm:$0xff] %vm752, %v740
  %758 = vst.msk [vmem:[%s3 + $0x28] sm:$0xff] %vm752, %v741
  %759 = vst.msk [vmem:[%s3 + $0x30] sm:$0xff] %vm752, %v742
  %760 = vst.msk [vmem:[%s3 + $0x38] sm:$0xff] %vm752, %v743
  %761 = vst.msk [vmem:[%s3 + $0x40] sm:$0xff] %vm752, %v744
  %762 = vst.msk [vmem:[%s3 + $0x48] sm:$0xff] %vm752, %v745
  %763 = vst.msk [vmem:[%s3 + $0x50] sm:$0xff] %vm752, %v746
  %764 = vst.msk [vmem:[%s3 + $0x58] sm:$0xff] %vm752, %v747
  %765 = vst.msk [vmem:[%s3 + $0x60] sm:$0xff] %vm752, %v748
  %766 = vst.msk [vmem:[%s3 + $0x68] sm:$0xff] %vm752, %v749
  %767 = vst.msk [vmem:[%s3 + $0x70] sm:$0xff] %vm752, %v750
  %768 = vst.msk [vmem:[%s3 + $0x78] sm:$0xff] %vm752, %v751
  // Predicated region
  $region14: #{convnet2_forward.3} parent=0 // pred_check
    _
  $region15: #{convnet2_forward.3} parent=0 // pred_check_branch
    %770 = sbr.rel (0) target = $region17
  $region16: #{convnet2_forward.3} parent=0 // pred_region
    _
  $region17: #{convnet2_forward.3} parent=0 // pred_fallthru
    _
  // Predicated region
  $region18: #{convnet2_forward.3} parent=0 // pred_check
    _
  $region19: #{convnet2_forward.3} parent=0 // pred_check_branch
    %772 = sbr.rel (0) target = $region21
  $region20: #{convnet2_forward.3} parent=0 // pred_region
    _
  $region21: #{convnet2_forward.3} parent=0 // pred_fallthru
    _

// kernel: convnet2_forward.4
$region0: #{convnet2_forward.4}
  #allocation0 [shape = 'u32[]', space=smem, size = 0x4, offset = 0x4, fixed_abs, tag = 'smem constant byte address 0x4 - core index']
  #allocation1 [shape = 'u32[144,128]{1,0:T(1,128)}', space=vmem, size = 0x12000, scoped, tag = 'internal scratch']
  %s0 = inlined_call_operand.vmem [shape: f32[4,32,144], index: 0, kind: input, shape index: {}]
  %s1 = inlined_call_operand.vmem [shape: f32[144,32], index: 1, kind: input, shape index: {}]
  %s2 = inlined_call_operand.vmem [shape: f32[1,32], index: 2, kind: input, shape index: {}]
  %s3 = inlined_call_operand.vmem [shape: f32[32,32], index: 3, kind: output, shape index: {}]
  %s4 = sld [smem:[#allocation0]]
  $region22: #{convnet2_forward.4} parent=0
    _
  %s6 = ssub.s32 1, %s4
  %s7 = scalar_select 0, %s6, %s4
  // Predicated region
  $region2: #{convnet2_forward.4} parent=0 // pred_check
    _
  $region3: #{convnet2_forward.4} parent=0 // pred_check_branch
    %9 = sbr.rel (0) target = $region5
  $region4: #{convnet2_forward.4} parent=0 // pred_region
    _
  $region5: #{convnet2_forward.4} parent=0 // pred_fallthru
    _
  // Predicated region
  $region6: #{convnet2_forward.4} parent=0 // pred_check
    _
  $region7: #{convnet2_forward.4} parent=0 // pred_check_branch
    %11 = sbr.rel (0) target = $region9
  $region8: #{convnet2_forward.4} parent=0 // pred_region
    _
  $region9: #{convnet2_forward.4} parent=0 // pred_fallthru
    _
  // Predicated region
  $region10: #{convnet2_forward.4} parent=0 // pred_check
    _
  $region11: #{convnet2_forward.4} parent=0 // pred_check_branch
    %13 = sbr.rel (0) target = $region13
  $region12: #{convnet2_forward.4} parent=0 // pred_region
    _
  $region13: #{convnet2_forward.4} parent=0 // pred_fallthru
    _
  %v14 = vld [vmem:[%s0] sm:$0xff]
  %v15 = vld [vmem:[%s0 + $0x8] sm:$0xff]
  %v16 = vld [vmem:[%s0 + $0x10] sm:$0xff]
  %v17 = vld [vmem:[%s0 + $0x18] sm:$0xff]
  %v18 = vld [vmem:[%s0 + $0x20] sm:$0xff]
  %v19 = vld [vmem:[%s0 + $0x28] sm:$0xff]
  %v20 = vld [vmem:[%s0 + $0x30] sm:$0xff]
  %v21 = vld [vmem:[%s0 + $0x38] sm:$0xff]
  %v22 = vld [vmem:[%s0 + $0x40] sm:$0xff]
  %v23 = vld [vmem:[%s0 + $0x48] sm:$0xff]
  %v24 = vld [vmem:[%s0 + $0x50] sm:$0xff]
  %v25 = vld [vmem:[%s0 + $0x58] sm:$0xff]
  %v26 = vld [vmem:[%s0 + $0x60] sm:$0xff]
  %v27 = vld [vmem:[%s0 + $0x68] sm:$0xff]
  %v28 = vld [vmem:[%s0 + $0x70] sm:$0xff]
  %v29 = vld [vmem:[%s0 + $0x78] sm:$0xff]
  %v30 = vld [vmem:[%s0 + $0x80] sm:$0xff]
  %v31 = vld [vmem:[%s0 + $0x88] sm:$0xff]
  %v32 = vld [vmem:[%s0 + $0x90] sm:$0xff]
  %v33 = vld [vmem:[%s0 + $0x98] sm:$0xff]
  %v34 = vld [vmem:[%s0 + $0xa0] sm:$0xff]
  %v35 = vld [vmem:[%s0 + $0xa8] sm:$0xff]
  %v36 = vld [vmem:[%s0 + $0xb0] sm:$0xff]
  %v37 = vld [vmem:[%s0 + $0xb8] sm:$0xff]
  %v38 = vld [vmem:[%s0 + $0xc0] sm:$0xff]
  %v39 = vld [vmem:[%s0 + $0xc8] sm:$0xff]
  %v40 = vld [vmem:[%s0 + $0xd0] sm:$0xff]
  %v41 = vld [vmem:[%s0 + $0xd8] sm:$0xff]
  %v42 = vld [vmem:[%s0 + $0xe0] sm:$0xff]
  %v43 = vld [vmem:[%s0 + $0xe8] sm:$0xff]
  %v44 = vld [vmem:[%s0 + $0xf0] sm:$0xff]
  %v45 = vld [vmem:[%s0 + $0xf8] sm:$0xff]
  %v46 = vld [vmem:[%s1] sm:$0xff]
  %v47 = vld [vmem:[%s1 + $0x8] sm:$0xff]
  %v48 = vld [vmem:[%s1 + $0x10] sm:$0xff]
  %v49 = vld [vmem:[%s1 + $0x18] sm:$0xff]
  %v50 = vld [vmem:[%s1 + $0x20] sm:$0xff]
  %v51 = vld [vmem:[%s1 + $0x28] sm:$0xff]
  %v52 = vld [vmem:[%s1 + $0x30] sm:$0xff]
  %v53 = vld [vmem:[%s1 + $0x38] sm:$0xff]
  %v54 = vld [vmem:[%s1 + $0x40] sm:$0xff]
  %v55 = vld [vmem:[%s1 + $0x48] sm:$0xff]
  %v56 = vld [vmem:[%s1 + $0x50] sm:$0xff]
  %v57 = vld [vmem:[%s1 + $0x58] sm:$0xff]
  %v58 = vld [vmem:[%s1 + $0x60] sm:$0xff]
  %v59 = vld [vmem:[%s1 + $0x68] sm:$0xff]
  %v60 = vld [vmem:[%s1 + $0x70] sm:$0xff]
  %v61 = vld [vmem:[%s1 + $0x78] sm:$0xff]
  %v62 = vld [vmem:[%s1 + $0x80] sm:$0xff]
  %v63 = vld [vmem:[%s1 + $0x88] sm:$0xff]
  %vm64 = vcmask 130048
  %v66 = vsel %vm64, %v15, 0
  %v69 = vsel %vm64, %v17, 0
  %v72 = vsel %vm64, %v19, 0
  %v75 = vsel %vm64, %v21, 0
  %v78 = vsel %vm64, %v23, 0
  %v81 = vsel %vm64, %v25, 0
  %v84 = vsel %vm64, %v27, 0
  %v87 = vsel %vm64, %v29, 0
  %v90 = vsel %vm64, %v31, 0
  %v93 = vsel %vm64, %v33, 0
  %v96 = vsel %vm64, %v35, 0
  %v99 = vsel %vm64, %v37, 0
  %v102 = vsel %vm64, %v39, 0
  %v105 = vsel %vm64, %v41, 0
  %v108 = vsel %vm64, %v43, 0
  %v111 = vsel %vm64, %v45, 0
  %113 = vmatprep.subr.mxu0 0.0
  %114 = vmatpush1.msra.mxu0 %v46
  %115 = vmatprep.subr.mxu0 0.0
  %116 = vmatpush1.msra.mxu0 %v47
  %117 = vmatprep.subr.mxu0 0.0
  %118 = vmatpush1.msra.mxu0 %v48
  %119 = vmatprep.subr.mxu0 0.0
  %120 = vmatpush1.msra.mxu0 %v49
  %121 = vmatprep.subr.mxu0 0.0
  %122 = vmatpush1.msra.mxu0 %v50
  %123 = vmatprep.subr.mxu0 0.0
  %124 = vmatpush1.msra.mxu0 %v51
  %125 = vmatprep.subr.mxu0 0.0
  %126 = vmatpush1.msra.mxu0 %v52
  %127 = vmatprep.subr.mxu0 0.0
  %128 = vmatpush1.msra.mxu0 %v53
  %129 = vmatprep.subr.mxu0 0.0
  %130 = vmatpush1.msra.mxu0 %v54
  %131 = vmatprep.subr.mxu0 0.0
  %132 = vmatpush1.msra.mxu0 %v55
  %133 = vmatprep.subr.mxu0 0.0
  %134 = vmatpush1.msra.mxu0 %v56
  %135 = vmatprep.subr.mxu0 0.0
  %136 = vmatpush1.msra.mxu0 %v57
  %137 = vmatprep.subr.mxu0 0.0
  %138 = vmatpush1.msra.mxu0 %v58
  %139 = vmatprep.subr.mxu0 0.0
  %140 = vmatpush1.msra.mxu0 %v59
  %141 = vmatprep.subr.mxu0 0.0
  %142 = vmatpush1.msra.mxu0 %v60
  %143 = vmatprep.subr.mxu0 0.0
  %144 = vmatpush1.msra.mxu0 %v61
  %145 = vmatprep.subr.mxu0 0.0
  %146 = vmatpush1.msra.mxu0 %v62
  %147 = vmatprep.subr.mxu0 0.0
  %148 = vmatpush1.msra.mxu0 %v63
  %149 = vmatprep.subr.mxu0 0.0
  %150 = vmatpush1.msra.mxu0 0.0
  %151 = vmatprep.subr.mxu0 0.0
  %152 = vmatpush1.msra.mxu0 0.0
  %153 = vmatprep.subr.mxu0 0.0
  %154 = vmatpush1.msra.mxu0 0.0
  %155 = vmatprep.subr.mxu0 0.0
  %156 = vmatpush1.msra.mxu0 0.0
  %157 = vmatprep.subr.mxu0 0.0
  %158 = vmatpush1.msra.mxu0 0.0
  %159 = vmatprep.subr.mxu0 0.0
  %160 = vmatpush1.msra.mxu0 0.0
  %161 = vmatprep.subr.mxu0 0.0
  %162 = vmatpush1.msra.mxu0 0.0
  %163 = vmatprep.subr.mxu0 0.0
  %164 = vmatpush1.msra.mxu0 0.0
  %165 = vmatprep.subr.mxu0 0.0
  %166 = vmatpush1.msra.mxu0 0.0
  %167 = vmatprep.subr.mxu0 0.0
  %168 = vmatpush1.msra.mxu0 0.0
  %169 = vmatprep.subr.mxu0 0.0
  %170 = vmatpush1.msra.mxu0 0.0
  %171 = vmatprep.subr.mxu0 0.0
  %172 = vmatpush1.msra.mxu0 0.0
  %173 = vmatprep.subr.mxu0 0.0
  %174 = vmatpush1.msra.mxu0 0.0
  %175 = vmatprep.subr.mxu0 0.0
  %176 = vmatpush1.msra.mxu0 0.0
  %177 = vmatprep.mubr.f32.mxu0 %v66
  %178 = vmatmul.mubr.f32.gmra.mrb[0].mxu0 %v14
  %v179 = vpop.f32.mrb[0].mxu0
  %v180 = vadd.f32 0.0, %v179
  %v181 = vpop.f32.mrb[0].mxu0
  %182 = vmatprep.mubr.f32.mxu0 %v69
  %183 = vmatmul.mubr.f32.gmra.mrb[0].mxu0 %v16
  %v184 = vpop.f32.mrb[0].mxu0
  %v185 = vadd.f32 0.0, %v184
  %v186 = vpop.f32.mrb[0].mxu0
  %187 = vmatprep.mubr.f32.mxu0 %v72
  %188 = vmatmul.mubr.f32.gmra.mrb[0].mxu0 %v18
  %v189 = vpop.f32.mrb[0].mxu0
  %v190 = vadd.f32 0.0, %v189
  %v191 = vpop.f32.mrb[0].mxu0
  %192 = vmatprep.mubr.f32.mxu0 %v75
  %193 = vmatmul.mubr.f32.gmra.mrb[0].mxu0 %v20
  %v194 = vpop.f32.mrb[0].mxu0
  %v195 = vadd.f32 0.0, %v194
  %v196 = vpop.f32.mrb[0].mxu0
  %197 = vmatprep.mubr.f32.mxu0 %v78
  %198 = vmatmul.mubr.f32.gmra.mrb[0].mxu0 %v22
  %v199 = vpop.f32.mrb[0].mxu0
  %v200 = vadd.f32 0.0, %v199
  %v201 = vpop.f32.mrb[0].mxu0
  %202 = vmatprep.mubr.f32.mxu0 %v81
  %203 = vmatmul.mubr.f32.gmra.mrb[0].mxu0 %v24
  %v204 = vpop.f32.mrb[0].mxu0
  %v205 = vadd.f32 0.0, %v204
  %v206 = vpop.f32.mrb[0].mxu0
  %207 = vmatprep.mubr.f32.mxu0 %v84
  %208 = vmatmul.mubr.f32.gmra.mrb[0].mxu0 %v26
  %v209 = vpop.f32.mrb[0].mxu0
  %v210 = vadd.f32 0.0, %v209
  %v211 = vpop.f32.mrb[0].mxu0
  %212 = vmatprep.mubr.f32.mxu0 %v87
  %213 = vmatmul.mubr.f32.gmra.mrb[0].mxu0 %v28
  %v214 = vpop.f32.mrb[0].mxu0
  %v215 = vadd.f32 0.0, %v214
  %v216 = vpop.f32.mrb[0].mxu0
  %217 = vmatprep.mubr.f32.mxu0 %v90
  %218 = vmatmul.mubr.f32.gmra.mrb[0].mxu0 %v30
  %v219 = vpop.f32.mrb[0].mxu0
  %v220 = vadd.f32 0.0, %v219
  %v221 = vpop.f32.mrb[0].mxu0
  %222 = vmatprep.mubr.f32.mxu0 %v93
  %223 = vmatmul.mubr.f32.gmra.mrb[0].mxu0 %v32
  %v224 = vpop.f32.mrb[0].mxu0
  %v225 = vadd.f32 0.0, %v224
  %v226 = vpop.f32.mrb[0].mxu0
  %227 = vmatprep.mubr.f32.mxu0 %v96
  %228 = vmatmul.mubr.f32.gmra.mrb[0].mxu0 %v34
  %v229 = vpop.f32.mrb[0].mxu0
  %v230 = vadd.f32 0.0, %v229
  %v231 = vpop.f32.mrb[0].mxu0
  %232 = vmatprep.mubr.f32.mxu0 %v99
  %233 = vmatmul.mubr.f32.gmra.mrb[0].mxu0 %v36
  %v234 = vpop.f32.mrb[0].mxu0
  %v235 = vadd.f32 0.0, %v234
  %v236 = vpop.f32.mrb[0].mxu0
  %237 = vmatprep.mubr.f32.mxu0 %v102
  %238 = vmatmul.mubr.f32.gmra.mrb[0].mxu0 %v38
  %v239 = vpop.f32.mrb[0].mxu0
  %v240 = vadd.f32 0.0, %v239
  %v241 = vpop.f32.mrb[0].mxu0
  %242 = vmatprep.mubr.f32.mxu0 %v105
  %243 = vmatmul.mubr.f32.gmra.mrb[0].mxu0 %v40
  %v244 = vpop.f32.mrb[0].mxu0
  %v245 = vadd.f32 0.0, %v244
  %v246 = vpop.f32.mrb[0].mxu0
  %247 = vmatprep.mubr.f32.mxu0 %v108
  %248 = vmatmul.mubr.f32.gmra.mrb[0].mxu0 %v42
  %v249 = vpop.f32.mrb[0].mxu0
  %v250 = vadd.f32 0.0, %v249
  %v251 = vpop.f32.mrb[0].mxu0
  %252 = vmatprep.mubr.f32.mxu0 %v111
  %253 = vmatmul.mubr.f32.gmra.mrb[0].mxu0 %v44
  %v254 = vpop.f32.mrb[0].mxu0
  %v255 = vadd.f32 0.0, %v254
  %v256 = vpop.f32.mrb[0].mxu0
  %257 = vdwg.mxu0
  %v258 = vmax.f32 %v180, %v200
  %v259 = vmax.f32 %v185, %v205
  %v260 = vmax.f32 %v190, %v210
  %v261 = vmax.f32 %v195, %v215
  %v262 = vmax.f32 %v220, %v240
  %v263 = vmax.f32 %v225, %v245
  %v264 = vmax.f32 %v230, %v250
  %v265 = vmax.f32 %v235, %v255
  %v266 = vmax.f32 %v258, %v262
  %v267 = vmax.f32 %v259, %v263
  %v268 = vmax.f32 %v260, %v264
  %v269 = vmax.f32 %v261, %v265
  %v270 = vld [vmem:[%s2] sm:$0x1]
  %v272 = vlaneseq
  %v273 = vshrl.u32 %v272, 7
  %v274 = vsub.s32 0, %v273
  %v275 = vrot.slane %v270, %v274
  %v277 = vadd.f32 %v266, %v275
  %v278 = vadd.f32 %v267, %v275
  %v279 = vadd.f32 %v268, %v275
  %v280 = vadd.f32 %v269, %v275
  %v281 = vmax.f32 %v277, 0.0
  %v282 = vmax.f32 %v278, 0.0
  %v283 = vmax.f32 %v279, 0.0
  %v284 = vmax.f32 %v280, 0.0
  %vm285 = vcmask 261120
  %286 = vst.msk [vmem:[%s3] sm:$0xff] %vm285, %v281
  %287 = vst.msk [vmem:[%s3 + $0x8] sm:$0xff] %vm285, %v282
  %288 = vst.msk [vmem:[%s3 + $0x10] sm:$0xff] %vm285, %v283
  %289 = vst.msk [vmem:[%s3 + $0x18] sm:$0xff] %vm285, %v284
  // Predicated region
  $region14: #{convnet2_forward.4} parent=0 // pred_check
    _
  $region15: #{convnet2_forward.4} parent=0 // pred_check_branch
    %291 = sbr.rel (0) target = $region17
  $region16: #{convnet2_forward.4} parent=0 // pred_region
    _
  $region17: #{convnet2_forward.4} parent=0 // pred_fallthru
    _
  // Predicated region
  $region18: #{convnet2_forward.4} parent=0 // pred_check
    _
  $region19: #{convnet2_forward.4} parent=0 // pred_check_branch
    %293 = sbr.rel (0) target = $region21
  $region20: #{convnet2_forward.4} parent=0 // pred_region
    _
  $region21: #{convnet2_forward.4} parent=0 // pred_fallthru
    _

// kernel: convnet2_forward.5
$region0: #{convnet2_forward.5}
  #allocation0 [shape = 'u32[]', space=smem, size = 0x4, offset = 0x4, fixed_abs, tag = 'smem constant byte address 0x4 - core index']
  #allocation1 [shape = 'u32[144,128]{1,0:T(1,128)}', space=vmem, size = 0x12000, scoped, tag = 'internal scratch']
  #allocation2 [shape = 'f32[1,1]{1,0:T(1,128)S(1)}', space=vmem, size = 0x200, scoped, tag = 'scoped memory for convnet2_forward.5']
  %s0 = inlined_call_operand.vmem [shape: f32[2,512], index: 0, kind: input, shape index: {}]
  %s1 = inlined_call_operand.vmem [shape: f32[512,512], index: 1, kind: input, shape index: {}]
  %s2 = inlined_call_operand.vmem [shape: f32[1,512], index: 2, kind: input, shape index: {}]
  %s3 = inlined_call_operand.vmem [shape: f32[512,128], index: 3, kind: input, shape index: {}]
  %s4 = inlined_call_operand.vmem [shape: f32[1,128], index: 4, kind: input, shape index: {}]
  %s5 = inlined_call_operand.vmem [shape: f32[1,128], index: 5, kind: input, shape index: {}]
  %s6 = inlined_call_operand.<no memory space> [shape: f32[1,1], index: 6, kind: input, shape index: {}]
  %s7 = inlined_call_operand.vmem [shape: f32[2,1], index: 7, kind: output, shape index: {}]
  %s8 = sld [smem:[#allocation0]]
  $region38: #{convnet2_forward.5} parent=0
    _
  %s10 = ssub.s32 1, %s8
  %s11 = scalar_select 0, %s10, %s8
  %v12 = vstv %s6
  %13 = vst [vmem:[#allocation2] sm:$0x1] %v12
  // Predicated region
  $region2: #{convnet2_forward.5} parent=0 // pred_check
    _
  $region3: #{convnet2_forward.5} parent=0 // pred_check_branch
    %15 = sbr.rel (0) target = $region5
  $region4: #{convnet2_forward.5} parent=0 // pred_region
    _
  $region5: #{convnet2_forward.5} parent=0 // pred_fallthru
    _
  // Predicated region
  $region6: #{convnet2_forward.5} parent=0 // pred_check
    _
  $region7: #{convnet2_forward.5} parent=0 // pred_check_branch
    %17 = sbr.rel (0) target = $region9
  $region8: #{convnet2_forward.5} parent=0 // pred_region
    _
  $region9: #{convnet2_forward.5} parent=0 // pred_fallthru
    _
  // Predicated region
  $region10: #{convnet2_forward.5} parent=0 // pred_check
    _
  $region11: #{convnet2_forward.5} parent=0 // pred_check_branch
    %19 = sbr.rel (0) target = $region13
  $region12: #{convnet2_forward.5} parent=0 // pred_region
    _
  $region13: #{convnet2_forward.5} parent=0 // pred_fallthru
    _
  // Predicated region
  $region14: #{convnet2_forward.5} parent=0 // pred_check
    _
  $region15: #{convnet2_forward.5} parent=0 // pred_check_branch
    %21 = sbr.rel (0) target = $region17
  $region16: #{convnet2_forward.5} parent=0 // pred_region
    _
  $region17: #{convnet2_forward.5} parent=0 // pred_fallthru
    _
  // Predicated region
  $region18: #{convnet2_forward.5} parent=0 // pred_check
    _
  $region19: #{convnet2_forward.5} parent=0 // pred_check_branch
    %23 = sbr.rel (0) target = $region21
  $region20: #{convnet2_forward.5} parent=0 // pred_region
    _
  $region21: #{convnet2_forward.5} parent=0 // pred_fallthru
    _
  // Predicated region
  $region22: #{convnet2_forward.5} parent=0 // pred_check
    _
  $region23: #{convnet2_forward.5} parent=0 // pred_check_branch
    %25 = sbr.rel (0) target = $region25
  $region24: #{convnet2_forward.5} parent=0 // pred_region
    _
  $region25: #{convnet2_forward.5} parent=0 // pred_fallthru
    _
  // Predicated region
  $region26: #{convnet2_forward.5} parent=0 // pred_check
    _
  $region27: #{convnet2_forward.5} parent=0 // pred_check_branch
    %27 = sbr.rel (0) target = $region29
  $region28: #{convnet2_forward.5} parent=0 // pred_region
    _
  $region29: #{convnet2_forward.5} parent=0 // pred_fallthru
    _
  %v28 = vld [vmem:[%s0] sm:$0xff]
  %v29 = vld [vmem:[%s1] sm:$0xff]
  %v30 = vld [vmem:[%s1 + $0x8] sm:$0xff]
  %v31 = vld [vmem:[%s1 + $0x10] sm:$0xff]
  %v32 = vld [vmem:[%s1 + $0x18] sm:$0xff]
  %v33 = vld [vmem:[%s1 + $0x20] sm:$0xff]
  %v34 = vld [vmem:[%s1 + $0x28] sm:$0xff]
  %v35 = vld [vmem:[%s1 + $0x30] sm:$0xff]
  %v36 = vld [vmem:[%s1 + $0x38] sm:$0xff]
  %v37 = vld [vmem:[%s1 + $0x40] sm:$0xff]
  %v38 = vld [vmem:[%s1 + $0x48] sm:$0xff]
  %v39 = vld [vmem:[%s1 + $0x50] sm:$0xff]
  %v40 = vld [vmem:[%s1 + $0x58] sm:$0xff]
  %v41 = vld [vmem:[%s1 + $0x60] sm:$0xff]
  %v42 = vld [vmem:[%s1 + $0x68] sm:$0xff]
  %v43 = vld [vmem:[%s1 + $0x70] sm:$0xff]
  %v44 = vld [vmem:[%s1 + $0x78] sm:$0xff]
  %v45 = vld [vmem:[%s1 + $0x80] sm:$0xff]
  %v46 = vld [vmem:[%s1 + $0x88] sm:$0xff]
  %v47 = vld [vmem:[%s1 + $0x90] sm:$0xff]
  %v48 = vld [vmem:[%s1 + $0x98] sm:$0xff]
  %v49 = vld [vmem:[%s1 + $0xa0] sm:$0xff]
  %v50 = vld [vmem:[%s1 + $0xa8] sm:$0xff]
  %v51 = vld [vmem:[%s1 + $0xb0] sm:$0xff]
  %v52 = vld [vmem:[%s1 + $0xb8] sm:$0xff]
  %v53 = vld [vmem:[%s1 + $0xc0] sm:$0xff]
  %v54 = vld [vmem:[%s1 + $0xc8] sm:$0xff]
  %v55 = vld [vmem:[%s1 + $0xd0] sm:$0xff]
  %v56 = vld [vmem:[%s1 + $0xd8] sm:$0xff]
  %v57 = vld [vmem:[%s1 + $0xe0] sm:$0xff]
  %v58 = vld [vmem:[%s1 + $0xe8] sm:$0xff]
  %v59 = vld [vmem:[%s1 + $0xf0] sm:$0xff]
  %v60 = vld [vmem:[%s1 + $0xf8] sm:$0xff]
  %v61 = vld [vmem:[%s1 + $0x100] sm:$0xff]
  %v62 = vld [vmem:[%s1 + $0x108] sm:$0xff]
  %v63 = vld [vmem:[%s1 + $0x110] sm:$0xff]
  %v64 = vld [vmem:[%s1 + $0x118] sm:$0xff]
  %v65 = vld [vmem:[%s1 + $0x120] sm:$0xff]
  %v66 = vld [vmem:[%s1 + $0x128] sm:$0xff]
  %v67 = vld [vmem:[%s1 + $0x130] sm:$0xff]
  %v68 = vld [vmem:[%s1 + $0x138] sm:$0xff]
  %v69 = vld [vmem:[%s1 + $0x140] sm:$0xff]
  %v70 = vld [vmem:[%s1 + $0x148] sm:$0xff]
  %v71 = vld [vmem:[%s1 + $0x150] sm:$0xff]
  %v72 = vld [vmem:[%s1 + $0x158] sm:$0xff]
  %v73 = vld [vmem:[%s1 + $0x160] sm:$0xff]
  %v74 = vld [vmem:[%s1 + $0x168] sm:$0xff]
  %v75 = vld [vmem:[%s1 + $0x170] sm:$0xff]
  %v76 = vld [vmem:[%s1 + $0x178] sm:$0xff]
  %v77 = vld [vmem:[%s1 + $0x180] sm:$0xff]
  %v78 = vld [vmem:[%s1 + $0x188] sm:$0xff]
  %v79 = vld [vmem:[%s1 + $0x190] sm:$0xff]
  %v80 = vld [vmem:[%s1 + $0x198] sm:$0xff]
  %v81 = vld [vmem:[%s1 + $0x1a0] sm:$0xff]
  %v82 = vld [vmem:[%s1 + $0x1a8] sm:$0xff]
  %v83 = vld [vmem:[%s1 + $0x1b0] sm:$0xff]
  %v84 = vld [vmem:[%s1 + $0x1b8] sm:$0xff]
  %v85 = vld [vmem:[%s1 + $0x1c0] sm:$0xff]
  %v86 = vld [vmem:[%s1 + $0x1c8] sm:$0xff]
  %v87 = vld [vmem:[%s1 + $0x1d0] sm:$0xff]
  %v88 = vld [vmem:[%s1 + $0x1d8] sm:$0xff]
  %v89 = vld [vmem:[%s1 + $0x1e0] sm:$0xff]
  %v90 = vld [vmem:[%s1 + $0x1e8] sm:$0xff]
  %v91 = vld [vmem:[%s1 + $0x1f0] sm:$0xff]
  %v92 = vld [vmem:[%s1 + $0x1f8] sm:$0xff]
  %v93 = vld [vmem:[%s1 + $0x200] sm:$0xff]
  %v94 = vld [vmem:[%s1 + $0x208] sm:$0xff]
  %v95 = vld [vmem:[%s1 + $0x210] sm:$0xff]
  %v96 = vld [vmem:[%s1 + $0x218] sm:$0xff]
  %v97 = vld [vmem:[%s1 + $0x220] sm:$0xff]
  %v98 = vld [vmem:[%s1 + $0x228] sm:$0xff]
  %v99 = vld [vmem:[%s1 + $0x230] sm:$0xff]
  %v100 = vld [vmem:[%s1 + $0x238] sm:$0xff]
  %v101 = vld [vmem:[%s1 + $0x240] sm:$0xff]
  %v102 = vld [vmem:[%s1 + $0x248] sm:$0xff]
  %v103 = vld [vmem:[%s1 + $0x250] sm:$0xff]
  %v104 = vld [vmem:[%s1 + $0x258] sm:$0xff]
  %v105 = vld [vmem:[%s1 + $0x260] sm:$0xff]
  %v106 = vld [vmem:[%s1 + $0x268] sm:$0xff]
  %v107 = vld [vmem:[%s1 + $0x270] sm:$0xff]
  %v108 = vld [vmem:[%s1 + $0x278] sm:$0xff]
  %v109 = vld [vmem:[%s1 + $0x280] sm:$0xff]
  %v110 = vld [vmem:[%s1 + $0x288] sm:$0xff]
  %v111 = vld [vmem:[%s1 + $0x290] sm:$0xff]
  %v112 = vld [vmem:[%s1 + $0x298] sm:$0xff]
  %v113 = vld [vmem:[%s1 + $0x2a0] sm:$0xff]
  %v114 = vld [vmem:[%s1 + $0x2a8] sm:$0xff]
  %v115 = vld [vmem:[%s1 + $0x2b0] sm:$0xff]
  %v116 = vld [vmem:[%s1 + $0x2b8] sm:$0xff]
  %v117 = vld [vmem:[%s1 + $0x2c0] sm:$0xff]
  %v118 = vld [vmem:[%s1 + $0x2c8] sm:$0xff]
  %v119 = vld [vmem:[%s1 + $0x2d0] sm:$0xff]
  %v120 = vld [vmem:[%s1 + $0x2d8] sm:$0xff]
  %v121 = vld [vmem:[%s1 + $0x2e0] sm:$0xff]
  %v122 = vld [vmem:[%s1 + $0x2e8] sm:$0xff]
  %v123 = vld [vmem:[%s1 + $0x2f0] sm:$0xff]
  %v124 = vld [vmem:[%s1 + $0x2f8] sm:$0xff]
  %v125 = vld [vmem:[%s1 + $0x300] sm:$0xff]
  %v126 = vld [vmem:[%s1 + $0x308] sm:$0xff]
  %v127 = vld [vmem:[%s1 + $0x310] sm:$0xff]
  %v128 = vld [vmem:[%s1 + $0x318] sm:$0xff]
  %v129 = vld [vmem:[%s1 + $0x320] sm:$0xff]
  %v130 = vld [vmem:[%s1 + $0x328] sm:$0xff]
  %v131 = vld [vmem:[%s1 + $0x330] sm:$0xff]
  %v132 = vld [vmem:[%s1 + $0x338] sm:$0xff]
  %v133 = vld [vmem:[%s1 + $0x340] sm:$0xff]
  %v134 = vld [vmem:[%s1 + $0x348] sm:$0xff]
  %v135 = vld [vmem:[%s1 + $0x350] sm:$0xff]
  %v136 = vld [vmem:[%s1 + $0x358] sm:$0xff]
  %v137 = vld [vmem:[%s1 + $0x360] sm:$0xff]
  %v138 = vld [vmem:[%s1 + $0x368] sm:$0xff]
  %v139 = vld [vmem:[%s1 + $0x370] sm:$0xff]
  %v140 = vld [vmem:[%s1 + $0x378] sm:$0xff]
  %v141 = vld [vmem:[%s1 + $0x380] sm:$0xff]
  %v142 = vld [vmem:[%s1 + $0x388] sm:$0xff]
  %v143 = vld [vmem:[%s1 + $0x390] sm:$0xff]
  %v144 = vld [vmem:[%s1 + $0x398] sm:$0xff]
  %v145 = vld [vmem:[%s1 + $0x3a0] sm:$0xff]
  %v146 = vld [vmem:[%s1 + $0x3a8] sm:$0xff]
  %v147 = vld [vmem:[%s1 + $0x3b0] sm:$0xff]
  %v148 = vld [vmem:[%s1 + $0x3b8] sm:$0xff]
  %v149 = vld [vmem:[%s1 + $0x3c0] sm:$0xff]
  %v150 = vld [vmem:[%s1 + $0x3c8] sm:$0xff]
  %v151 = vld [vmem:[%s1 + $0x3d0] sm:$0xff]
  %v152 = vld [vmem:[%s1 + $0x3d8] sm:$0xff]
  %v153 = vld [vmem:[%s1 + $0x3e0] sm:$0xff]
  %v154 = vld [vmem:[%s1 + $0x3e8] sm:$0xff]
  %v155 = vld [vmem:[%s1 + $0x3f0] sm:$0xff]
  %v156 = vld [vmem:[%s1 + $0x3f8] sm:$0xff]
  %v157 = vld [vmem:[%s1 + $0x400] sm:$0xff]
  %v158 = vld [vmem:[%s1 + $0x408] sm:$0xff]
  %v159 = vld [vmem:[%s1 + $0x410] sm:$0xff]
  %v160 = vld [vmem:[%s1 + $0x418] sm:$0xff]
  %v161 = vld [vmem:[%s1 + $0x420] sm:$0xff]
  %v162 = vld [vmem:[%s1 + $0x428] sm:$0xff]
  %v163 = vld [vmem:[%s1 + $0x430] sm:$0xff]
  %v164 = vld [vmem:[%s1 + $0x438] sm:$0xff]
  %v165 = vld [vmem:[%s1 + $0x440] sm:$0xff]
  %v166 = vld [vmem:[%s1 + $0x448] sm:$0xff]
  %v167 = vld [vmem:[%s1 + $0x450] sm:$0xff]
  %v168 = vld [vmem:[%s1 + $0x458] sm:$0xff]
  %v169 = vld [vmem:[%s1 + $0x460] sm:$0xff]
  %v170 = vld [vmem:[%s1 + $0x468] sm:$0xff]
  %v171 = vld [vmem:[%s1 + $0x470] sm:$0xff]
  %v172 = vld [vmem:[%s1 + $0x478] sm:$0xff]
  %v173 = vld [vmem:[%s1 + $0x480] sm:$0xff]
  %v174 = vld [vmem:[%s1 + $0x488] sm:$0xff]
  %v175 = vld [vmem:[%s1 + $0x490] sm:$0xff]
  %v176 = vld [vmem:[%s1 + $0x498] sm:$0xff]
  %v177 = vld [vmem:[%s1 + $0x4a0] sm:$0xff]
  %v178 = vld [vmem:[%s1 + $0x4a8] sm:$0xff]
  %v179 = vld [vmem:[%s1 + $0x4b0] sm:$0xff]
  %v180 = vld [vmem:[%s1 + $0x4b8] sm:$0xff]
  %v181 = vld [vmem:[%s1 + $0x4c0] sm:$0xff]
  %v182 = vld [vmem:[%s1 + $0x4c8] sm:$0xff]
  %v183 = vld [vmem:[%s1 + $0x4d0] sm:$0xff]
  %v184 = vld [vmem:[%s1 + $0x4d8] sm:$0xff]
  %v185 = vld [vmem:[%s1 + $0x4e0] sm:$0xff]
  %v186 = vld [vmem:[%s1 + $0x4e8] sm:$0xff]
  %v187 = vld [vmem:[%s1 + $0x4f0] sm:$0xff]
  %v188 = vld [vmem:[%s1 + $0x4f8] sm:$0xff]
  %v189 = vld [vmem:[%s1 + $0x500] sm:$0xff]
  %v190 = vld [vmem:[%s1 + $0x508] sm:$0xff]
  %v191 = vld [vmem:[%s1 + $0x510] sm:$0xff]
  %v192 = vld [vmem:[%s1 + $0x518] sm:$0xff]
  %v193 = vld [vmem:[%s1 + $0x520] sm:$0xff]
  %v194 = vld [vmem:[%s1 + $0x528] sm:$0xff]
  %v195 = vld [vmem:[%s1 + $0x530] sm:$0xff]
  %v196 = vld [vmem:[%s1 + $0x538] sm:$0xff]
  %v197 = vld [vmem:[%s1 + $0x540] sm:$0xff]
  %v198 = vld [vmem:[%s1 + $0x548] sm:$0xff]
  %v199 = vld [vmem:[%s1 + $0x550] sm:$0xff]
  %v200 = vld [vmem:[%s1 + $0x558] sm:$0xff]
  %v201 = vld [vmem:[%s1 + $0x560] sm:$0xff]
  %v202 = vld [vmem:[%s1 + $0x568] sm:$0xff]
  %v203 = vld [vmem:[%s1 + $0x570] sm:$0xff]
  %v204 = vld [vmem:[%s1 + $0x578] sm:$0xff]
  %v205 = vld [vmem:[%s1 + $0x580] sm:$0xff]
  %v206 = vld [vmem:[%s1 + $0x588] sm:$0xff]
  %v207 = vld [vmem:[%s1 + $0x590] sm:$0xff]
  %v208 = vld [vmem:[%s1 + $0x598] sm:$0xff]
  %v209 = vld [vmem:[%s1 + $0x5a0] sm:$0xff]
  %v210 = vld [vmem:[%s1 + $0x5a8] sm:$0xff]
  %v211 = vld [vmem:[%s1 + $0x5b0] sm:$0xff]
  %v212 = vld [vmem:[%s1 + $0x5b8] sm:$0xff]
  %v213 = vld [vmem:[%s1 + $0x5c0] sm:$0xff]
  %v214 = vld [vmem:[%s1 + $0x5c8] sm:$0xff]
  %v215 = vld [vmem:[%s1 + $0x5d0] sm:$0xff]
  %v216 = vld [vmem:[%s1 + $0x5d8] sm:$0xff]
  %v217 = vld [vmem:[%s1 + $0x5e0] sm:$0xff]
  %v218 = vld [vmem:[%s1 + $0x5e8] sm:$0xff]
  %v219 = vld [vmem:[%s1 + $0x5f0] sm:$0xff]
  %v220 = vld [vmem:[%s1 + $0x5f8] sm:$0xff]
  %v221 = vld [vmem:[%s1 + $0x600] sm:$0xff]
  %v222 = vld [vmem:[%s1 + $0x608] sm:$0xff]
  %v223 = vld [vmem:[%s1 + $0x610] sm:$0xff]
  %v224 = vld [vmem:[%s1 + $0x618] sm:$0xff]
  %v225 = vld [vmem:[%s1 + $0x620] sm:$0xff]
  %v226 = vld [vmem:[%s1 + $0x628] sm:$0xff]
  %v227 = vld [vmem:[%s1 + $0x630] sm:$0xff]
  %v228 = vld [vmem:[%s1 + $0x638] sm:$0xff]
  %v229 = vld [vmem:[%s1 + $0x640] sm:$0xff]
  %v230 = vld [vmem:[%s1 + $0x648] sm:$0xff]
  %v231 = vld [vmem:[%s1 + $0x650] sm:$0xff]
  %v232 = vld [vmem:[%s1 + $0x658] sm:$0xff]
  %v233 = vld [vmem:[%s1 + $0x660] sm:$0xff]
  %v234 = vld [vmem:[%s1 + $0x668] sm:$0xff]
  %v235 = vld [vmem:[%s1 + $0x670] sm:$0xff]
  %v236 = vld [vmem:[%s1 + $0x678] sm:$0xff]
  %v237 = vld [vmem:[%s1 + $0x680] sm:$0xff]
  %v238 = vld [vmem:[%s1 + $0x688] sm:$0xff]
  %v239 = vld [vmem:[%s1 + $0x690] sm:$0xff]
  %v240 = vld [vmem:[%s1 + $0x698] sm:$0xff]
  %v241 = vld [vmem:[%s1 + $0x6a0] sm:$0xff]
  %v242 = vld [vmem:[%s1 + $0x6a8] sm:$0xff]
  %v243 = vld [vmem:[%s1 + $0x6b0] sm:$0xff]
  %v244 = vld [vmem:[%s1 + $0x6b8] sm:$0xff]
  %v245 = vld [vmem:[%s1 + $0x6c0] sm:$0xff]
  %v246 = vld [vmem:[%s1 + $0x6c8] sm:$0xff]
  %v247 = vld [vmem:[%s1 + $0x6d0] sm:$0xff]
  %v248 = vld [vmem:[%s1 + $0x6d8] sm:$0xff]
  %v249 = vld [vmem:[%s1 + $0x6e0] sm:$0xff]
  %v250 = vld [vmem:[%s1 + $0x6e8] sm:$0xff]
  %v251 = vld [vmem:[%s1 + $0x6f0] sm:$0xff]
  %v252 = vld [vmem:[%s1 + $0x6f8] sm:$0xff]
  %v253 = vld [vmem:[%s1 + $0x700] sm:$0xff]
  %v254 = vld [vmem:[%s1 + $0x708] sm:$0xff]
  %v255 = vld [vmem:[%s1 + $0x710] sm:$0xff]
  %v256 = vld [vmem:[%s1 + $0x718] sm:$0xff]
  %v257 = vld [vmem:[%s1 + $0x720] sm:$0xff]
  %v258 = vld [vmem:[%s1 + $0x728] sm:$0xff]
  %v259 = vld [vmem:[%s1 + $0x730] sm:$0xff]
  %v260 = vld [vmem:[%s1 + $0x738] sm:$0xff]
  %v261 = vld [vmem:[%s1 + $0x740] sm:$0xff]
  %v262 = vld [vmem:[%s1 + $0x748] sm:$0xff]
  %v263 = vld [vmem:[%s1 + $0x750] sm:$0xff]
  %v264 = vld [vmem:[%s1 + $0x758] sm:$0xff]
  %v265 = vld [vmem:[%s1 + $0x760] sm:$0xff]
  %v266 = vld [vmem:[%s1 + $0x768] sm:$0xff]
  %v267 = vld [vmem:[%s1 + $0x770] sm:$0xff]
  %v268 = vld [vmem:[%s1 + $0x778] sm:$0xff]
  %v269 = vld [vmem:[%s1 + $0x780] sm:$0xff]
  %v270 = vld [vmem:[%s1 + $0x788] sm:$0xff]
  %v271 = vld [vmem:[%s1 + $0x790] sm:$0xff]
  %v272 = vld [vmem:[%s1 + $0x798] sm:$0xff]
  %v273 = vld [vmem:[%s1 + $0x7a0] sm:$0xff]
  %v274 = vld [vmem:[%s1 + $0x7a8] sm:$0xff]
  %v275 = vld [vmem:[%s1 + $0x7b0] sm:$0xff]
  %v276 = vld [vmem:[%s1 + $0x7b8] sm:$0xff]
  %v277 = vld [vmem:[%s1 + $0x7c0] sm:$0xff]
  %v278 = vld [vmem:[%s1 + $0x7c8] sm:$0xff]
  %v279 = vld [vmem:[%s1 + $0x7d0] sm:$0xff]
  %v280 = vld [vmem:[%s1 + $0x7d8] sm:$0xff]
  %v281 = vld [vmem:[%s1 + $0x7e0] sm:$0xff]
  %v282 = vld [vmem:[%s1 + $0x7e8] sm:$0xff]
  %v283 = vld [vmem:[%s1 + $0x7f0] sm:$0xff]
  %v284 = vld [vmem:[%s1 + $0x7f8] sm:$0xff]
  %v285 = vld [vmem:[%s2] sm:$0xf]
  %v287 = vlaneseq
  %v288 = vshrl.u32 %v287, 7
  %v289 = vsub.s32 0, %v288
  %v290 = vrot.slane %v285, %v289
  %v291 = vlaneseq
  %v292 = vshrl.u32 %v291, 7
  %v293 = vsub.s32 1, %v292
  %v294 = vrot.slane %v285, %v293
  %v295 = vlaneseq
  %v296 = vshrl.u32 %v295, 7
  %v297 = vsub.s32 2, %v296
  %v298 = vrot.slane %v285, %v297
  %v299 = vlaneseq
  %v300 = vshrl.u32 %v299, 7
  %v301 = vsub.s32 3, %v300
  %v302 = vrot.slane %v285, %v301
  %v308 = vcombine.high %v28, %v28
  %v310 = vunpack.c.l.s4 1983009808
  %v311 = vunpack.c.0.s8 %v310
  %v312 = vlaneseq
  %v313 = vshrl.u32 %v312, 7
  %v314 = vsub.s32 %v311, %v313
  %v315 = vrot.slane %v28, %v314
  %v317 = vunpack.c.l.s4 1983009808
  %v318 = vunpack.c.0.s8 %v317
  %v319 = vlaneseq
  %v320 = vshrl.u32 %v319, 7
  %v321 = vsub.s32 %v318, %v320
  %v322 = vrot.slane %v308, %v321
  %v323 = vcombine.high %v315, %v315
  %v324 = vcombine.high %v322, %v322
  %329 = vmatprep.subr.mxu0 %v30
  %330 = vmatpush1.msra.mxu0 %v29
  %331 = vmatprep.subr.mxu0 %v34
  %332 = vmatpush1.msra.mxu0 %v33
  %333 = vmatprep.subr.mxu0 %v38
  %334 = vmatpush1.msra.mxu0 %v37
  %335 = vmatprep.subr.mxu0 %v42
  %336 = vmatpush1.msra.mxu0 %v41
  %337 = vmatprep.subr.mxu0 %v46
  %338 = vmatpush1.msra.mxu0 %v45
  %339 = vmatprep.subr.mxu0 %v50
  %340 = vmatpush1.msra.mxu0 %v49
  %341 = vmatprep.subr.mxu0 %v54
  %342 = vmatpush1.msra.mxu0 %v53
  %343 = vmatprep.subr.mxu0 %v58
  %344 = vmatpush1.msra.mxu0 %v57
  %345 = vmatprep.subr.mxu0 %v62
  %346 = vmatpush1.msra.mxu0 %v61
  %347 = vmatprep.subr.mxu0 %v66
  %348 = vmatpush1.msra.mxu0 %v65
  %349 = vmatprep.subr.mxu0 %v70
  %350 = vmatpush1.msra.mxu0 %v69
  %351 = vmatprep.subr.mxu0 %v74
  %352 = vmatpush1.msra.mxu0 %v73
  %353 = vmatprep.subr.mxu0 %v78
  %354 = vmatpush1.msra.mxu0 %v77
  %355 = vmatprep.subr.mxu0 %v82
  %356 = vmatpush1.msra.mxu0 %v81
  %357 = vmatprep.subr.mxu0 %v86
  %358 = vmatpush1.msra.mxu0 %v85
  %359 = vmatprep.subr.mxu0 %v90
  %360 = vmatpush1.msra.mxu0 %v89
  %361 = vmatprep.subr.mxu0 %v94
  %362 = vmatpush1.msra.mxu0 %v93
  %363 = vmatprep.subr.mxu0 %v98
  %364 = vmatpush1.msra.mxu0 %v97
  %365 = vmatprep.subr.mxu0 %v102
  %366 = vmatpush1.msra.mxu0 %v101
  %367 = vmatprep.subr.mxu0 %v106
  %368 = vmatpush1.msra.mxu0 %v105
  %369 = vmatprep.subr.mxu0 %v110
  %370 = vmatpush1.msra.mxu0 %v109
  %371 = vmatprep.subr.mxu0 %v114
  %372 = vmatpush1.msra.mxu0 %v113
  %373 = vmatprep.subr.mxu0 %v118
  %374 = vmatpush1.msra.mxu0 %v117
  %375 = vmatprep.subr.mxu0 %v122
  %376 = vmatpush1.msra.mxu0 %v121
  %377 = vmatprep.subr.mxu0 %v126
  %378 = vmatpush1.msra.mxu0 %v125
  %379 = vmatprep.subr.mxu0 %v130
  %380 = vmatpush1.msra.mxu0 %v129
  %381 = vmatprep.subr.mxu0 %v134
  %382 = vmatpush1.msra.mxu0 %v133
  %383 = vmatprep.subr.mxu0 %v138
  %384 = vmatpush1.msra.mxu0 %v137
  %385 = vmatprep.subr.mxu0 %v142
  %386 = vmatpush1.msra.mxu0 %v141
  %387 = vmatprep.subr.mxu0 %v146
  %388 = vmatpush1.msra.mxu0 %v145
  %389 = vmatprep.subr.mxu0 %v150
  %390 = vmatpush1.msra.mxu0 %v149
  %391 = vmatprep.subr.mxu0 %v154
  %392 = vmatpush1.msra.mxu0 %v153
  %393 = vmatprep.mubr.f32.mxu0 %v323
  %394 = vmatmul.mubr.f32.gmra.mrb[0].mxu0 %v315
  %v395 = vpop.f32.mrb[0].mxu0
  %v396 = vadd.f32 %v290, %v395
  %v397 = vpop.f32.mrb[0].mxu0
  %v398 = vadd.f32 %v294, %v397
  %399 = vdwg.mxu0
  %400 = vmatprep.subr.mxu0 %v158
  %401 = vmatpush1.msra.mxu0 %v157
  %402 = vmatprep.subr.mxu0 %v162
  %403 = vmatpush1.msra.mxu0 %v161
  %404 = vmatprep.subr.mxu0 %v166
  %405 = vmatpush1.msra.mxu0 %v165
  %406 = vmatprep.subr.mxu0 %v170
  %407 = vmatpush1.msra.mxu0 %v169
  %408 = vmatprep.subr.mxu0 %v174
  %409 = vmatpush1.msra.mxu0 %v173
  %410 = vmatprep.subr.mxu0 %v178
  %411 = vmatpush1.msra.mxu0 %v177
  %412 = vmatprep.subr.mxu0 %v182
  %413 = vmatpush1.msra.mxu0 %v181
  %414 = vmatprep.subr.mxu0 %v186
  %415 = vmatpush1.msra.mxu0 %v185
  %416 = vmatprep.subr.mxu0 %v190
  %417 = vmatpush1.msra.mxu0 %v189
  %418 = vmatprep.subr.mxu0 %v194
  %419 = vmatpush1.msra.mxu0 %v193
  %420 = vmatprep.subr.mxu0 %v198
  %421 = vmatpush1.msra.mxu0 %v197
  %422 = vmatprep.subr.mxu0 %v202
  %423 = vmatpush1.msra.mxu0 %v201
  %424 = vmatprep.subr.mxu0 %v206
  %425 = vmatpush1.msra.mxu0 %v205
  %426 = vmatprep.subr.mxu0 %v210
  %427 = vmatpush1.msra.mxu0 %v209
  %428 = vmatprep.subr.mxu0 %v214
  %429 = vmatpush1.msra.mxu0 %v213
  %430 = vmatprep.subr.mxu0 %v218
  %431 = vmatpush1.msra.mxu0 %v217
  %432 = vmatprep.subr.mxu0 %v222
  %433 = vmatpush1.msra.mxu0 %v221
  %434 = vmatprep.subr.mxu0 %v226
  %435 = vmatpush1.msra.mxu0 %v225
  %436 = vmatprep.subr.mxu0 %v230
  %437 = vmatpush1.msra.mxu0 %v229
  %438 = vmatprep.subr.mxu0 %v234
  %439 = vmatpush1.msra.mxu0 %v233
  %440 = vmatprep.subr.mxu0 %v238
  %441 = vmatpush1.msra.mxu0 %v237
  %442 = vmatprep.subr.mxu0 %v242
  %443 = vmatpush1.msra.mxu0 %v241
  %444 = vmatprep.subr.mxu0 %v246
  %445 = vmatpush1.msra.mxu0 %v245
  %446 = vmatprep.subr.mxu0 %v250
  %447 = vmatpush1.msra.mxu0 %v249
  %448 = vmatprep.subr.mxu0 %v254
  %449 = vmatpush1.msra.mxu0 %v253
  %450 = vmatprep.subr.mxu0 %v258
  %451 = vmatpush1.msra.mxu0 %v257
  %452 = vmatprep.subr.mxu0 %v262
  %453 = vmatpush1.msra.mxu0 %v261
  %454 = vmatprep.subr.mxu0 %v266
  %455 = vmatpush1.msra.mxu0 %v265
  %456 = vmatprep.subr.mxu0 %v270
  %457 = vmatpush1.msra.mxu0 %v269
  %458 = vmatprep.subr.mxu0 %v274
  %459 = vmatpush1.msra.mxu0 %v273
  %460 = vmatprep.subr.mxu0 %v278
  %461 = vmatpush1.msra.mxu0 %v277
  %462 = vmatprep.subr.mxu0 %v282
  %463 = vmatpush1.msra.mxu0 %v281
  %464 = vmatprep.mubr.f32.mxu0 %v324
  %465 = vmatmul.mubr.f32.gmra.mrb[0].mxu0 %v322
  %v466 = vpop.f32.mrb[0].mxu0
  %v467 = vadd.f32 %v396, %v466
  %v468 = vpop.f32.mrb[0].mxu0
  %v469 = vadd.f32 %v398, %v468
  %470 = vdwg.mxu0
  %471 = vmatprep.subr.mxu0 %v32
  %472 = vmatpush1.msra.mxu0 %v31
  %473 = vmatprep.subr.mxu0 %v36
  %474 = vmatpush1.msra.mxu0 %v35
  %475 = vmatprep.subr.mxu0 %v40
  %476 = vmatpush1.msra.mxu0 %v39
  %477 = vmatprep.subr.mxu0 %v44
  %478 = vmatpush1.msra.mxu0 %v43
  %479 = vmatprep.subr.mxu0 %v48
  %480 = vmatpush1.msra.mxu0 %v47
  %481 = vmatprep.subr.mxu0 %v52
  %482 = vmatpush1.msra.mxu0 %v51
  %483 = vmatprep.subr.mxu0 %v56
  %484 = vmatpush1.msra.mxu0 %v55
  %485 = vmatprep.subr.mxu0 %v60
  %486 = vmatpush1.msra.mxu0 %v59
  %487 = vmatprep.subr.mxu0 %v64
  %488 = vmatpush1.msra.mxu0 %v63
  %489 = vmatprep.subr.mxu0 %v68
  %490 = vmatpush1.msra.mxu0 %v67
  %491 = vmatprep.subr.mxu0 %v72
  %492 = vmatpush1.msra.mxu0 %v71
  %493 = vmatprep.subr.mxu0 %v76
  %494 = vmatpush1.msra.mxu0 %v75
  %495 = vmatprep.subr.mxu0 %v80
  %496 = vmatpush1.msra.mxu0 %v79
  %497 = vmatprep.subr.mxu0 %v84
  %498 = vmatpush1.msra.mxu0 %v83
  %499 = vmatprep.subr.mxu0 %v88
  %500 = vmatpush1.msra.mxu0 %v87
  %501 = vmatprep.subr.mxu0 %v92
  %502 = vmatpush1.msra.mxu0 %v91
  %503 = vmatprep.subr.mxu0 %v96
  %504 = vmatpush1.msra.mxu0 %v95
  %505 = vmatprep.subr.mxu0 %v100
  %506 = vmatpush1.msra.mxu0 %v99
  %507 = vmatprep.subr.mxu0 %v104
  %508 = vmatpush1.msra.mxu0 %v103
  %509 = vmatprep.subr.mxu0 %v108
  %510 = vmatpush1.msra.mxu0 %v107
  %511 = vmatprep.subr.mxu0 %v112
  %512 = vmatpush1.msra.mxu0 %v111
  %513 = vmatprep.subr.mxu0 %v116
  %514 = vmatpush1.msra.mxu0 %v115
  %515 = vmatprep.subr.mxu0 %v120
  %516 = vmatpush1.msra.mxu0 %v119
  %517 = vmatprep.subr.mxu0 %v124
  %518 = vmatpush1.msra.mxu0 %v123
  %519 = vmatprep.subr.mxu0 %v128
  %520 = vmatpush1.msra.mxu0 %v127
  %521 = vmatprep.subr.mxu0 %v132
  %522 = vmatpush1.msra.mxu0 %v131
  %523 = vmatprep.subr.mxu0 %v136
  %524 = vmatpush1.msra.mxu0 %v135
  %525 = vmatprep.subr.mxu0 %v140
  %526 = vmatpush1.msra.mxu0 %v139
  %527 = vmatprep.subr.mxu0 %v144
  %528 = vmatpush1.msra.mxu0 %v143
  %529 = vmatprep.subr.mxu0 %v148
  %530 = vmatpush1.msra.mxu0 %v147
  %531 = vmatprep.subr.mxu0 %v152
  %532 = vmatpush1.msra.mxu0 %v151
  %533 = vmatprep.subr.mxu0 %v156
  %534 = vmatpush1.msra.mxu0 %v155
  %535 = vmatprep.mubr.f32.mxu0 %v323
  %536 = vmatmul.mubr.f32.gmra.mrb[0].mxu0 %v315
  %v537 = vpop.f32.mrb[0].mxu0
  %v538 = vadd.f32 %v298, %v537
  %v539 = vpop.f32.mrb[0].mxu0
  %v540 = vadd.f32 %v302, %v539
  %541 = vdwg.mxu0
  %542 = vmatprep.subr.mxu0 %v160
  %543 = vmatpush1.msra.mxu0 %v159
  %544 = vmatprep.subr.mxu0 %v164
  %545 = vmatpush1.msra.mxu0 %v163
  %546 = vmatprep.subr.mxu0 %v168
  %547 = vmatpush1.msra.mxu0 %v167
  %548 = vmatprep.subr.mxu0 %v172
  %549 = vmatpush1.msra.mxu0 %v171
  %550 = vmatprep.subr.mxu0 %v176
  %551 = vmatpush1.msra.mxu0 %v175
  %552 = vmatprep.subr.mxu0 %v180
  %553 = vmatpush1.msra.mxu0 %v179
  %554 = vmatprep.subr.mxu0 %v184
  %555 = vmatpush1.msra.mxu0 %v183
  %556 = vmatprep.subr.mxu0 %v188
  %557 = vmatpush1.msra.mxu0 %v187
  %558 = vmatprep.subr.mxu0 %v192
  %559 = vmatpush1.msra.mxu0 %v191
  %560 = vmatprep.subr.mxu0 %v196
  %561 = vmatpush1.msra.mxu0 %v195
  %562 = vmatprep.subr.mxu0 %v200
  %563 = vmatpush1.msra.mxu0 %v199
  %564 = vmatprep.subr.mxu0 %v204
  %565 = vmatpush1.msra.mxu0 %v203
  %566 = vmatprep.subr.mxu0 %v208
  %567 = vmatpush1.msra.mxu0 %v207
  %568 = vmatprep.subr.mxu0 %v212
  %569 = vmatpush1.msra.mxu0 %v211
  %570 = vmatprep.subr.mxu0 %v216
  %571 = vmatpush1.msra.mxu0 %v215
  %572 = vmatprep.subr.mxu0 %v220
  %573 = vmatpush1.msra.mxu0 %v219
  %574 = vmatprep.subr.mxu0 %v224
  %575 = vmatpush1.msra.mxu0 %v223
  %576 = vmatprep.subr.mxu0 %v228
  %577 = vmatpush1.msra.mxu0 %v227
  %578 = vmatprep.subr.mxu0 %v232
  %579 = vmatpush1.msra.mxu0 %v231
  %580 = vmatprep.subr.mxu0 %v236
  %581 = vmatpush1.msra.mxu0 %v235
  %582 = vmatprep.subr.mxu0 %v240
  %583 = vmatpush1.msra.mxu0 %v239
  %584 = vmatprep.subr.mxu0 %v244
  %585 = vmatpush1.msra.mxu0 %v243
  %586 = vmatprep.subr.mxu0 %v248
  %587 = vmatpush1.msra.mxu0 %v247
  %588 = vmatprep.subr.mxu0 %v252
  %589 = vmatpush1.msra.mxu0 %v251
  %590 = vmatprep.subr.mxu0 %v256
  %591 = vmatpush1.msra.mxu0 %v255
  %592 = vmatprep.subr.mxu0 %v260
  %593 = vmatpush1.msra.mxu0 %v259
  %594 = vmatprep.subr.mxu0 %v264
  %595 = vmatpush1.msra.mxu0 %v263
  %596 = vmatprep.subr.mxu0 %v268
  %597 = vmatpush1.msra.mxu0 %v267
  %598 = vmatprep.subr.mxu0 %v272
  %599 = vmatpush1.msra.mxu0 %v271
  %600 = vmatprep.subr.mxu0 %v276
  %601 = vmatpush1.msra.mxu0 %v275
  %602 = vmatprep.subr.mxu0 %v280
  %603 = vmatpush1.msra.mxu0 %v279
  %604 = vmatprep.subr.mxu0 %v284
  %605 = vmatpush1.msra.mxu0 %v283
  %606 = vmatprep.mubr.f32.mxu0 %v324
  %607 = vmatmul.mubr.f32.gmra.mrb[0].mxu0 %v322
  %v608 = vpop.f32.mrb[0].mxu0
  %v609 = vadd.f32 %v538, %v608
  %v610 = vpop.f32.mrb[0].mxu0
  %v611 = vadd.f32 %v540, %v610
  %612 = vdwg.mxu0
  %v613 = vmax.f32 %v467, 0.0
  %v614 = vmax.f32 %v469, 0.0
  %v615 = vmax.f32 %v609, 0.0
  %v616 = vmax.f32 %v611, 0.0
  %v617 = vld [vmem:[%s3] sm:$0xff]
  %v618 = vld [vmem:[%s3 + $0x8] sm:$0xff]
  %v619 = vld [vmem:[%s3 + $0x10] sm:$0xff]
  %v620 = vld [vmem:[%s3 + $0x18] sm:$0xff]
  %v621 = vld [vmem:[%s3 + $0x20] sm:$0xff]
  %v622 = vld [vmem:[%s3 + $0x28] sm:$0xff]
  %v623 = vld [vmem:[%s3 + $0x30] sm:$0xff]
  %v624 = vld [vmem:[%s3 + $0x38] sm:$0xff]
  %v625 = vld [vmem:[%s3 + $0x40] sm:$0xff]
  %v626 = vld [vmem:[%s3 + $0x48] sm:$0xff]
  %v627 = vld [vmem:[%s3 + $0x50] sm:$0xff]
  %v628 = vld [vmem:[%s3 + $0x58] sm:$0xff]
  %v629 = vld [vmem:[%s3 + $0x60] sm:$0xff]
  %v630 = vld [vmem:[%s3 + $0x68] sm:$0xff]
  %v631 = vld [vmem:[%s3 + $0x70] sm:$0xff]
  %v632 = vld [vmem:[%s3 + $0x78] sm:$0xff]
  %v633 = vld [vmem:[%s3 + $0x80] sm:$0xff]
  %v634 = vld [vmem:[%s3 + $0x88] sm:$0xff]
  %v635 = vld [vmem:[%s3 + $0x90] sm:$0xff]
  %v636 = vld [vmem:[%s3 + $0x98] sm:$0xff]
  %v637 = vld [vmem:[%s3 + $0xa0] sm:$0xff]
  %v638 = vld [vmem:[%s3 + $0xa8] sm:$0xff]
  %v639 = vld [vmem:[%s3 + $0xb0] sm:$0xff]
  %v640 = vld [vmem:[%s3 + $0xb8] sm:$0xff]
  %v641 = vld [vmem:[%s3 + $0xc0] sm:$0xff]
  %v642 = vld [vmem:[%s3 + $0xc8] sm:$0xff]
  %v643 = vld [vmem:[%s3 + $0xd0] sm:$0xff]
  %v644 = vld [vmem:[%s3 + $0xd8] sm:$0xff]
  %v645 = vld [vmem:[%s3 + $0xe0] sm:$0xff]
  %v646 = vld [vmem:[%s3 + $0xe8] sm:$0xff]
  %v647 = vld [vmem:[%s3 + $0xf0] sm:$0xff]
  %v648 = vld [vmem:[%s3 + $0xf8] sm:$0xff]
  %v649 = vld [vmem:[%s3 + $0x100] sm:$0xff]
  %v650 = vld [vmem:[%s3 + $0x108] sm:$0xff]
  %v651 = vld [vmem:[%s3 + $0x110] sm:$0xff]
  %v652 = vld [vmem:[%s3 + $0x118] sm:$0xff]
  %v653 = vld [vmem:[%s3 + $0x120] sm:$0xff]
  %v654 = vld [vmem:[%s3 + $0x128] sm:$0xff]
  %v655 = vld [vmem:[%s3 + $0x130] sm:$0xff]
  %v656 = vld [vmem:[%s3 + $0x138] sm:$0xff]
  %v657 = vld [vmem:[%s3 + $0x140] sm:$0xff]
  %v658 = vld [vmem:[%s3 + $0x148] sm:$0xff]
  %v659 = vld [vmem:[%s3 + $0x150] sm:$0xff]
  %v660 = vld [vmem:[%s3 + $0x158] sm:$0xff]
  %v661 = vld [vmem:[%s3 + $0x160] sm:$0xff]
  %v662 = vld [vmem:[%s3 + $0x168] sm:$0xff]
  %v663 = vld [vmem:[%s3 + $0x170] sm:$0xff]
  %v664 = vld [vmem:[%s3 + $0x178] sm:$0xff]
  %v665 = vld [vmem:[%s3 + $0x180] sm:$0xff]
  %v666 = vld [vmem:[%s3 + $0x188] sm:$0xff]
  %v667 = vld [vmem:[%s3 + $0x190] sm:$0xff]
  %v668 = vld [vmem:[%s3 + $0x198] sm:$0xff]
  %v669 = vld [vmem:[%s3 + $0x1a0] sm:$0xff]
  %v670 = vld [vmem:[%s3 + $0x1a8] sm:$0xff]
  %v671 = vld [vmem:[%s3 + $0x1b0] sm:$0xff]
  %v672 = vld [vmem:[%s3 + $0x1b8] sm:$0xff]
  %v673 = vld [vmem:[%s3 + $0x1c0] sm:$0xff]
  %v674 = vld [vmem:[%s3 + $0x1c8] sm:$0xff]
  %v675 = vld [vmem:[%s3 + $0x1d0] sm:$0xff]
  %v676 = vld [vmem:[%s3 + $0x1d8] sm:$0xff]
  %v677 = vld [vmem:[%s3 + $0x1e0] sm:$0xff]
  %v678 = vld [vmem:[%s3 + $0x1e8] sm:$0xff]
  %v679 = vld [vmem:[%s3 + $0x1f0] sm:$0xff]
  %v680 = vld [vmem:[%s3 + $0x1f8] sm:$0xff]
  %v681 = vld [vmem:[%s4] sm:$0x1]
  %v683 = vlaneseq
  %v684 = vshrl.u32 %v683, 7
  %v685 = vsub.s32 0, %v684
  %v686 = vrot.slane %v681, %v685
  %688 = vmatprep.subr.mxu0 0.0
  %689 = vmatpush1.msra.mxu0 %v617
  %690 = vmatprep.subr.mxu0 0.0
  %691 = vmatpush1.msra.mxu0 %v618
  %692 = vmatprep.subr.mxu0 0.0
  %693 = vmatpush1.msra.mxu0 %v619
  %694 = vmatprep.subr.mxu0 0.0
  %695 = vmatpush1.msra.mxu0 %v620
  %696 = vmatprep.subr.mxu0 0.0
  %697 = vmatpush1.msra.mxu0 %v621
  %698 = vmatprep.subr.mxu0 0.0
  %699 = vmatpush1.msra.mxu0 %v622
  %700 = vmatprep.subr.mxu0 0.0
  %701 = vmatpush1.msra.mxu0 %v623
  %702 = vmatprep.subr.mxu0 0.0
  %703 = vmatpush1.msra.mxu0 %v624
  %704 = vmatprep.subr.mxu0 0.0
  %705 = vmatpush1.msra.mxu0 %v625
  %706 = vmatprep.subr.mxu0 0.0
  %707 = vmatpush1.msra.mxu0 %v626
  %708 = vmatprep.subr.mxu0 0.0
  %709 = vmatpush1.msra.mxu0 %v627
  %710 = vmatprep.subr.mxu0 0.0
  %711 = vmatpush1.msra.mxu0 %v628
  %712 = vmatprep.subr.mxu0 0.0
  %713 = vmatpush1.msra.mxu0 %v629
  %714 = vmatprep.subr.mxu0 0.0
  %715 = vmatpush1.msra.mxu0 %v630
  %716 = vmatprep.subr.mxu0 0.0
  %717 = vmatpush1.msra.mxu0 %v631
  %718 = vmatprep.subr.mxu0 0.0
  %719 = vmatpush1.msra.mxu0 %v632
  %720 = vmatprep.subr.mxu0 0.0
  %721 = vmatpush1.msra.mxu0 %v633
  %722 = vmatprep.subr.mxu0 0.0
  %723 = vmatpush1.msra.mxu0 %v634
  %724 = vmatprep.subr.mxu0 0.0
  %725 = vmatpush1.msra.mxu0 %v635
  %726 = vmatprep.subr.mxu0 0.0
  %727 = vmatpush1.msra.mxu0 %v636
  %728 = vmatprep.subr.mxu0 0.0
  %729 = vmatpush1.msra.mxu0 %v637
  %730 = vmatprep.subr.mxu0 0.0
  %731 = vmatpush1.msra.mxu0 %v638
  %732 = vmatprep.subr.mxu0 0.0
  %733 = vmatpush1.msra.mxu0 %v639
  %734 = vmatprep.subr.mxu0 0.0
  %735 = vmatpush1.msra.mxu0 %v640
  %736 = vmatprep.subr.mxu0 0.0
  %737 = vmatpush1.msra.mxu0 %v641
  %738 = vmatprep.subr.mxu0 0.0
  %739 = vmatpush1.msra.mxu0 %v642
  %740 = vmatprep.subr.mxu0 0.0
  %741 = vmatpush1.msra.mxu0 %v643
  %742 = vmatprep.subr.mxu0 0.0
  %743 = vmatpush1.msra.mxu0 %v644
  %744 = vmatprep.subr.mxu0 0.0
  %745 = vmatpush1.msra.mxu0 %v645
  %746 = vmatprep.subr.mxu0 0.0
  %747 = vmatpush1.msra.mxu0 %v646
  %748 = vmatprep.subr.mxu0 0.0
  %749 = vmatpush1.msra.mxu0 %v647
  %750 = vmatprep.subr.mxu0 0.0
  %751 = vmatpush1.msra.mxu0 %v648
  %752 = vmatprep.mubr.f32.mxu0 %v614
  %753 = vmatmul.mubr.f32.gmra.mrb[0].mxu0 %v613
  %v754 = vpop.f32.mrb[0].mxu0
  %v755 = vadd.f32 %v686, %v754
  %v756 = vpop.f32.mrb[0].mxu0
  %757 = vdwg.mxu0
  %758 = vmatprep.subr.mxu0 0.0
  %759 = vmatpush1.msra.mxu0 %v649
  %760 = vmatprep.subr.mxu0 0.0
  %761 = vmatpush1.msra.mxu0 %v650
  %762 = vmatprep.subr.mxu0 0.0
  %763 = vmatpush1.msra.mxu0 %v651
  %764 = vmatprep.subr.mxu0 0.0
  %765 = vmatpush1.msra.mxu0 %v652
  %766 = vmatprep.subr.mxu0 0.0
  %767 = vmatpush1.msra.mxu0 %v653
  %768 = vmatprep.subr.mxu0 0.0
  %769 = vmatpush1.msra.mxu0 %v654
  %770 = vmatprep.subr.mxu0 0.0
  %771 = vmatpush1.msra.mxu0 %v655
  %772 = vmatprep.subr.mxu0 0.0
  %773 = vmatpush1.msra.mxu0 %v656
  %774 = vmatprep.subr.mxu0 0.0
  %775 = vmatpush1.msra.mxu0 %v657
  %776 = vmatprep.subr.mxu0 0.0
  %777 = vmatpush1.msra.mxu0 %v658
  %778 = vmatprep.subr.mxu0 0.0
  %779 = vmatpush1.msra.mxu0 %v659
  %780 = vmatprep.subr.mxu0 0.0
  %781 = vmatpush1.msra.mxu0 %v660
  %782 = vmatprep.subr.mxu0 0.0
  %783 = vmatpush1.msra.mxu0 %v661
  %784 = vmatprep.subr.mxu0 0.0
  %785 = vmatpush1.msra.mxu0 %v662
  %786 = vmatprep.subr.mxu0 0.0
  %787 = vmatpush1.msra.mxu0 %v663
  %788 = vmatprep.subr.mxu0 0.0
  %789 = vmatpush1.msra.mxu0 %v664
  %790 = vmatprep.subr.mxu0 0.0
  %791 = vmatpush1.msra.mxu0 %v665
  %792 = vmatprep.subr.mxu0 0.0
  %793 = vmatpush1.msra.mxu0 %v666
  %794 = vmatprep.subr.mxu0 0.0
  %795 = vmatpush1.msra.mxu0 %v667
  %796 = vmatprep.subr.mxu0 0.0
  %797 = vmatpush1.msra.mxu0 %v668
  %798 = vmatprep.subr.mxu0 0.0
  %799 = vmatpush1.msra.mxu0 %v669
  %800 = vmatprep.subr.mxu0 0.0
  %801 = vmatpush1.msra.mxu0 %v670
  %802 = vmatprep.subr.mxu0 0.0
  %803 = vmatpush1.msra.mxu0 %v671
  %804 = vmatprep.subr.mxu0 0.0
  %805 = vmatpush1.msra.mxu0 %v672
  %806 = vmatprep.subr.mxu0 0.0
  %807 = vmatpush1.msra.mxu0 %v673
  %808 = vmatprep.subr.mxu0 0.0
  %809 = vmatpush1.msra.mxu0 %v674
  %810 = vmatprep.subr.mxu0 0.0
  %811 = vmatpush1.msra.mxu0 %v675
  %812 = vmatprep.subr.mxu0 0.0
  %813 = vmatpush1.msra.mxu0 %v676
  %814 = vmatprep.subr.mxu0 0.0
  %815 = vmatpush1.msra.mxu0 %v677
  %816 = vmatprep.subr.mxu0 0.0
  %817 = vmatpush1.msra.mxu0 %v678
  %818 = vmatprep.subr.mxu0 0.0
  %819 = vmatpush1.msra.mxu0 %v679
  %820 = vmatprep.subr.mxu0 0.0
  %821 = vmatpush1.msra.mxu0 %v680
  %822 = vmatprep.mubr.f32.mxu0 %v616
  %823 = vmatmul.mubr.f32.gmra.mrb[0].mxu0 %v615
  %v824 = vpop.f32.mrb[0].mxu0
  %v825 = vadd.f32 %v755, %v824
  %v826 = vpop.f32.mrb[0].mxu0
  %827 = vdwg.mxu0
  %v828 = vmax.f32 %v825, 0.0
  %v829 = vld [vmem:[%s5] sm:$0x1]
  %v831 = vlaneseq
  %v832 = vshrl.u32 %v831, 7
  %v833 = vsub.s32 0, %v832
  %v834 = vrot.slane %v829, %v833
  %v836 = vmul.f32 %v828, %v834
  %vm837 = vcmask 1041408
  %v838 = vsel %vm837, %v836, 0.0
  %839 = vadd.xlane.f32.xlu0 %v838
  %v840 = vpop.xlane.xlu0 %839
  %v841 = vld [vmem:[#allocation2] sm:$0x1]
  %v843 = vlaneseq
  %v844 = vshrl.u32 %v843, 7
  %v845 = vsub.s32 0, %v844
  %v846 = vrot.slane %v841, %v845
  %v848 = vadd.f32 %v840, %v846
  %vm849 = vcmask 1024
  %850 = vst.msk [vmem:[%s7] sm:$0x3] %vm849, %v848
  // Predicated region
  $region30: #{convnet2_forward.5} parent=0 // pred_check
    _
  $region31: #{convnet2_forward.5} parent=0 // pred_check_branch
    %852 = sbr.rel (0) target = $region33
  $region32: #{convnet2_forward.5} parent=0 // pred_region
    _
  $region33: #{convnet2_forward.5} parent=0 // pred_fallthru
    _
  // Predicated region
  $region34: #{convnet2_forward.5} parent=0 // pred_check
    _
  $region35: #{convnet2_forward.5} parent=0 // pred_check_branch
    %854 = sbr.rel (0) target = $region37
  $region36: #{convnet2_forward.5} parent=0 // pred_region
    _
  $region37: #{convnet2_forward.5} parent=0 // pred_fallthru
    _

</llo_original>
